<compile_context>
chip_gen: v6e
topology: v6e:2x2x1
jax: 0.10.0
libtpu: 0.0.40
codegen_flags: <defaults>
</compile_context>

<pallas_src>
import functools

import jax
import jax.numpy as jnp
from jax.experimental import pallas as pl
from jax.experimental.pallas import tpu as pltpu


def _round_up(x, m):
    return (x + m - 1) // m * m


def _device_kind():
    try:
        return jax.devices()[0].device_kind.lower()
    except Exception:
        return ""


def _default_elementwise_dtype():
    # bf16 VALU exists on v6e/v7x; keep bias-add / ReLU in f32 elsewhere (v5e...).
    kind = _device_kind()
    if ("v6" in kind) or ("v7" in kind):
        return jnp.bfloat16
    return jnp.float32


def _num_tensorcores_per_chip():
    return 2 if "v7" in _device_kind() else 1


def _pick_vmem_limit_bytes():
    mib = 1024 * 1024
    cap = None
    try:
        cap = int(pltpu.get_tpu_info().vmem_capacity_bytes)
    except Exception:
        cap = None
    if not cap or cap <= 0:
        cap = 64 * mib if "v7" in _device_kind() else 128 * mib
    # Leave headroom for Mosaic internal scratch + I/O double buffers.
    return max(32 * mib, cap - 16 * mib)


def _const_block_spec(shape, single_buffer):
    zeros = (0,) * len(shape)
    index_map = lambda i, _z=zeros: _z
    if single_buffer:
        try:
            return pl.BlockSpec(shape, index_map, pipeline_mode=pl.Buffered(1))
        except TypeError:
            pass
    return pl.BlockSpec(shape, index_map)


# ---------------------------------------------------------------------------
# Pallas kernel: full MLP chain (matmuls + bias + ReLU) on one batch tile.
# ---------------------------------------------------------------------------
def _autoencoder_kernel(out_pads, ew_dtype, packed_w, x_ref, *refs):
    # refs = (w_slab,) or (w_0..w_{L-1},)  then bias_slab, out_ref
    out_ref = refs[-1]
    b_ref = refs[-2]
    w_refs = refs[:-2]
    n_layers = len(out_pads)

    bias_f32 = b_ref[...]                 # (L, max_out_pad) f32, read once
    bias_ew = bias_f32.astype(ew_dtype)   # one small cast (no-op when ew == f32)

    h = x_ref[...]                        # (tile_b, n_in_pad), already bf16

    for layer in range(n_layers):
        if packed_w:
            w = w_refs[0][layer]          # (in_pad, out_pad) slice of the slab
        else:
            w = w_refs[layer][...]
        op = out_pads[layer]
        # MXU matmul: bf16 operands, f32 accumulation.
        acc = jnp.dot(h.astype(w.dtype), w, preferred_element_type=jnp.float32)
        if layer < n_layers - 1:
            # Hidden layers: bias-add + ReLU in ew_dtype (bf16 on v6e/v7x).
            h = jnp.maximum(acc.astype(ew_dtype) + bias_ew[layer, :op], 0)
        else:
            # Final layer (no activation): keep f32, feeds the f32 store.
            h = acc + bias_f32[layer, :op]

    out_ref[...] = h.astype(out_ref.dtype)


# ---------------------------------------------------------------------------
# Wrapper: pads to lane-dense shapes, tiles the batch, calls pallas_call.
# ---------------------------------------------------------------------------
def autoencoder_forward(x, weights, biases, *, tile_batch=None,
                        weight_dtype=jnp.bfloat16, elementwise_dtype=None):
    """x: (B, n_in) float32. weights[i]: (in_i, out_i). biases[i]: (out_i,)."""
    B, n_in = x.shape
    n_layers = len(weights)
    n_out = weights[-1].shape[1]
    out_dtype = x.dtype

    if elementwise_dtype is None:
        elementwise_dtype = _default_elementwise_dtype()
    elementwise_dtype = jnp.dtype(elementwise_dtype)

    # ---- pad every layer width up to a multiple of 128 (lane-dense) ----
    in_pads = [_round_up(w.shape[0], 128) for w in weights]
    out_pads = [_round_up(w.shape[1], 128) for w in weights]
    n_in_pad = in_pads[0]
    n_out_pad = out_pads[-1]

    # ---- weights: single packed slab when all padded shapes agree ----
    uniform = len(set(in_pads)) == 1 and len(set(out_pads)) == 1
    if uniform:
        ip, op = in_pads[0], out_pads[0]
        w_slab = jnp.zeros((n_layers, ip, op), weight_dtype)
        for i, w in enumerate(weights):
            w_slab = w_slab.at[i, : w.shape[0], : w.shape[1]].set(
                w.astype(weight_dtype))
        w_args = [w_slab]
    else:
        w_args = []
        for w, ipi, opi in zip(weights, in_pads, out_pads):
            wp = jnp.zeros((ipi, opi), weight_dtype)
            wp = wp.at[: w.shape[0], : w.shape[1]].set(w.astype(weight_dtype))
            w_args.append(wp)

    # ---- biases: one f32 slab (L, max_out_pad) -> one DMA ----
    max_out_pad = max(out_pads)
    b_slab = jnp.zeros((n_layers, max_out_pad), jnp.float32)
    for i, b in enumerate(biases):
        b_slab = b_slab.at[i, : b.shape[0]].set(b.astype(jnp.float32))

    # ---- batch tiling (generation-aware; 8-row aligned) ----
    if tile_batch is None:
        B8 = max(8, _round_up(B, 8))
        cap = 1024
        if _num_tensorcores_per_chip() >= 2 and B8 >= 512:
            # v7x megacore: even 2-way split, each half >= 256 rows.
            tile_batch = min(cap, _round_up(pl.cdiv(B8, 2), 8))
        else:
            # Single TC (v5e/v6e): one big tile; grid steps are pure overhead.
            tile_batch = min(cap, B8)
    tile_batch = max(8, _round_up(int(tile_batch), 8))
    B_pad = _round_up(B, tile_batch)
    grid = (B_pad // tile_batch,)

    # ---- fused pad+cast of x into a bf16 buffer (halves activation DMA) ----
    in_dtype = jnp.dtype(weight_dtype)
    if B_pad == B and n_in_pad == n_in and x.dtype == in_dtype:
        x_pad = x
    else:
        x_pad = jnp.zeros((B_pad, n_in_pad), in_dtype).at[:B, :n_in].set(
            x.astype(in_dtype))

    kernel = functools.partial(
        _autoencoder_kernel, tuple(out_pads), elementwise_dtype, uniform)

    x_spec = pl.BlockSpec((tile_batch, n_in_pad), lambda i: (i, 0))
    out_spec = pl.BlockSpec((tile_batch, n_out_pad), lambda i: (i, 0))
    vmem_limit = _pick_vmem_limit_bytes()

    def _run(single_buffer):
        w_specs = [_const_block_spec(w.shape, single_buffer) for w in w_args]
        b_spec = _const_block_spec(b_slab.shape, single_buffer)
        return pl.pallas_call(
            kernel,
            out_shape=jax.ShapeDtypeStruct((B_pad, n_out_pad), out_dtype),
            grid_spec=pltpu.PrefetchScalarGridSpec(
                num_scalar_prefetch=0,
                grid=grid,
                in_specs=[x_spec] + w_specs + [b_spec],
                out_specs=out_spec,
            ),
            compiler_params=pltpu.CompilerParams(
                dimension_semantics=("parallel",),
                vmem_limit_bytes=vmem_limit,
            ),
        )(x_pad, *w_args, b_slab)

    try:
        y_pad = _run(True)
    except Exception:
        # pl.Buffered(1) not supported by this JAX build -> default buffering.
        y_pad = _run(False)

    return y_pad[:B, :n_out]


# ---------------------------------------------------------------------------
# Deterministic parameter construction (mirrors __init__ + XAVIER reset).
# ---------------------------------------------------------------------------
def build_autoencoder_params(key, n_in, n_out, min_n, max_n):
    """Returns (weights, biases), weights already in (in, out) layout."""
    dims = [(n_in, max_n)]                     # encoder first layer
    this_n = max_n
    while this_n > min_n:
        dims.append((this_n, this_n // 2))
        this_n //= 2
    this_n = min_n
    while this_n < max_n:
        dims.append((this_n, this_n * 2))      # decoder expansion layers
        this_n *= 2
    dims.append((max_n, n_out))                # final decoder layer (no ReLU)

    weights, biases = [], []
    for fan_in, fan_out in dims:
        key, sub = jax.random.split(key)
        # torch.nn.init.xavier_uniform_: U(-a, a), a = sqrt(6 / (fan_in + fan_out))
        bound = jnp.sqrt(6.0 / (fan_in + fan_out))
        w = jax.random.uniform(sub, (fan_in, fan_out), jnp.float32, -bound, bound)
        b = jnp.zeros((fan_out,), jnp.float32)  # bias reset to 0.0
        weights.append(w)
        biases.append(b)
    return weights, biases


# ---------------------------------------------------------------------------
# Pure-JAX reference (mirrors the kernel's dtype recipe for tight comparison).
# ---------------------------------------------------------------------------
def autoencoder_reference(x, weights, biases, weight_dtype=jnp.float32,
                          ew_dtype=jnp.float32):
    h = x.astype(weight_dtype)
    n_layers = len(weights)
    for i, (w, b) in enumerate(zip(weights, biases)):
        acc = jnp.dot(h.astype(weight_dtype), w.astype(weight_dtype),
                      preferred_element_type=jnp.float32)
        if i < n_layers - 1:
            h = jnp.maximum(acc.astype(ew_dtype) + b.astype(ew_dtype), 0)
        else:
            h = acc + b.astype(jnp.float32)
    return h.astype(jnp.float32)


if __name__ == "__main__":
    # Small shapes consistent with the module: n_in=16, n_out=16, min_n=8, max_n=32.
    n_in, n_out, min_n, max_n = 16, 16, 8, 32
    B = 64

    key = jax.random.PRNGKey(0)
    key, kx = jax.random.split(key)
    x = jax.random.normal(kx, (B, n_in), jnp.float32)

    weights, biases = build_autoencoder_params(key, n_in, n_out, min_n, max_n)

    ew_dtype = _default_elementwise_dtype()
    y = autoencoder_forward(x, weights, biases, weight_dtype=jnp.bfloat16,
                            elementwise_dtype=ew_dtype)
    y = jax.block_until_ready(y)
    assert y.shape == (B, n_out), y.shape

    # Check against a reference that mirrors the kernel's dtype recipe.
    y_ref = autoencoder_reference(x, weights, biases,
                                  weight_dtype=jnp.bfloat16, ew_dtype=ew_dtype)
    assert jnp.allclose(y, y_ref, atol=2e-2, rtol=2e-2), "mismatch vs matched reference"

    # Loose sanity check against the full-f32 reference (bf16 quantization tol).
    y_f32 = autoencoder_reference(x, weights, biases,
                                  weight_dtype=jnp.float32, ew_dtype=jnp.float32)
    assert jnp.allclose(y, y_f32, atol=1e-1, rtol=1e-1), "mismatch vs f32 reference"

    print("KERNEL_OK")
</pallas_src>

<mosaic_0001>
module attributes {stable_mosaic.version = 11 : i64} {
  func.func @_autoencoder_kernel(%arg0: i32, %arg1: memref<64x128xbf16, #tpu.memory_space<vmem>>, %arg2: memref<6x128x128xbf16, #tpu.memory_space<vmem>>, %arg3: memref<6x128xf32, #tpu.memory_space<vmem>>, %arg4: memref<64x128xf32, #tpu.memory_space<vmem>>) attributes {dimension_semantics = [#tpu.dimension_semantics<parallel>], iteration_bounds = array<i64: 1>, scalar_prefetch = 0 : i64, scratch_operands = 0 : i64, tpu.core_type = #tpu.core_type<tc>, window_params = [{transform_indices = @transform_0, window_bounds = array<i64: 64, 128>}, {pipeline_mode = #tpu.pipeline_mode<synchronous>, transform_indices = @transform_1, window_bounds = array<i64: 6, 128, 128>}, {pipeline_mode = #tpu.pipeline_mode<synchronous>, transform_indices = @transform_2, window_bounds = array<i64: 6, 128>}, {transform_indices = @transform_3, window_bounds = array<i64: 64, 128>}]} {
    %c0 = arith.constant 0 : index
    %c0_0 = arith.constant 0 : index
    %0 = vector.load %arg3[%c0, %c0_0] : memref<6x128xf32, #tpu.memory_space<vmem>>, vector<6x128xf32>
    %c0_1 = arith.constant 0 : index
    %c0_2 = arith.constant 0 : index
    %1 = vector.load %arg1[%c0_1, %c0_2] : memref<64x128xbf16, #tpu.memory_space<vmem>>, vector<64x128xbf16>
    %c0_3 = arith.constant 0 : index
    %c0_4 = arith.constant 0 : index
    %c0_5 = arith.constant 0 : index
    %2 = vector.load %arg2[%c0_3, %c0_4, %c0_5] : memref<6x128x128xbf16, #tpu.memory_space<vmem>>, vector<1x128x128xbf16>
    %3 = vector.shape_cast %2 : vector<1x128x128xbf16> to vector<128x128xbf16>
    %cst = arith.constant dense<0.000000e+00> : vector<64x128xf32>
    %4 = tpu.matmul %1, %3, %cst {dimension_numbers = #tpu.dot_dimension_numbers<[1], [0], [0], [1], [0, 0, 1, 1], [], []>} : vector<64x128xbf16>, vector<128x128xbf16>, vector<64x128xf32> -> vector<64x128xf32>
    %5 = vector.extract_strided_slice %0 {offsets = [0, 0], sizes = [1, 128], strides = [1, 1]} : vector<6x128xf32> to vector<1x128xf32>
    %6 = vector.shape_cast %5 : vector<1x128xf32> to vector<128xf32>
    %7 = vector.shape_cast %6 : vector<128xf32> to vector<1x128xf32>
    %8 = vector.broadcast %7 : vector<1x128xf32> to vector<64x128xf32>
    %9 = arith.addf %4, %8 : vector<64x128xf32>
    %cst_6 = arith.constant 0.000000e+00 : f32
    %10 = vector.broadcast %cst_6 : f32 to vector<64x128xf32>
    %11 = arith.maximumf %9, %10 : vector<64x128xf32>
    %c1 = arith.constant 1 : index
    %c0_7 = arith.constant 0 : index
    %c0_8 = arith.constant 0 : index
    %12 = vector.load %arg2[%c1, %c0_7, %c0_8] : memref<6x128x128xbf16, #tpu.memory_space<vmem>>, vector<1x128x128xbf16>
    %13 = vector.shape_cast %12 : vector<1x128x128xbf16> to vector<128x128xbf16>
    %14 = arith.truncf %11 : vector<64x128xf32> to vector<64x128xbf16>
    %cst_9 = arith.constant dense<0.000000e+00> : vector<64x128xf32>
    %15 = tpu.matmul %14, %13, %cst_9 {dimension_numbers = #tpu.dot_dimension_numbers<[1], [0], [0], [1], [0, 0, 1, 1], [], []>} : vector<64x128xbf16>, vector<128x128xbf16>, vector<64x128xf32> -> vector<64x128xf32>
    %16 = vector.extract_strided_slice %0 {offsets = [1, 0], sizes = [1, 128], strides = [1, 1]} : vector<6x128xf32> to vector<1x128xf32>
    %17 = vector.shape_cast %16 : vector<1x128xf32> to vector<128xf32>
    %18 = vector.shape_cast %17 : vector<128xf32> to vector<1x128xf32>
    %19 = vector.broadcast %18 : vector<1x128xf32> to vector<64x128xf32>
    %20 = arith.addf %15, %19 : vector<64x128xf32>
    %cst_10 = arith.constant 0.000000e+00 : f32
    %21 = vector.broadcast %cst_10 : f32 to vector<64x128xf32>
    %22 = arith.maximumf %20, %21 : vector<64x128xf32>
    %c2 = arith.constant 2 : index
    %c0_11 = arith.constant 0 : index
    %c0_12 = arith.constant 0 : index
    %23 = vector.load %arg2[%c2, %c0_11, %c0_12] : memref<6x128x128xbf16, #tpu.memory_space<vmem>>, vector<1x128x128xbf16>
    %24 = vector.shape_cast %23 : vector<1x128x128xbf16> to vector<128x128xbf16>
    %25 = arith.truncf %22 : vector<64x128xf32> to vector<64x128xbf16>
    %cst_13 = arith.constant dense<0.000000e+00> : vector<64x128xf32>
    %26 = tpu.matmul %25, %24, %cst_13 {dimension_numbers = #tpu.dot_dimension_numbers<[1], [0], [0], [1], [0, 0, 1, 1], [], []>} : vector<64x128xbf16>, vector<128x128xbf16>, vector<64x128xf32> -> vector<64x128xf32>
    %27 = vector.extract_strided_slice %0 {offsets = [2, 0], sizes = [1, 128], strides = [1, 1]} : vector<6x128xf32> to vector<1x128xf32>
    %28 = vector.shape_cast %27 : vector<1x128xf32> to vector<128xf32>
    %29 = vector.shape_cast %28 : vector<128xf32> to vector<1x128xf32>
    %30 = vector.broadcast %29 : vector<1x128xf32> to vector<64x128xf32>
    %31 = arith.addf %26, %30 : vector<64x128xf32>
    %cst_14 = arith.constant 0.000000e+00 : f32
    %32 = vector.broadcast %cst_14 : f32 to vector<64x128xf32>
    %33 = arith.maximumf %31, %32 : vector<64x128xf32>
    %c3 = arith.constant 3 : index
    %c0_15 = arith.constant 0 : index
    %c0_16 = arith.constant 0 : index
    %34 = vector.load %arg2[%c3, %c0_15, %c0_16] : memref<6x128x128xbf16, #tpu.memory_space<vmem>>, vector<1x128x128xbf16>
    %35 = vector.shape_cast %34 : vector<1x128x128xbf16> to vector<128x128xbf16>
    %36 = arith.truncf %33 : vector<64x128xf32> to vector<64x128xbf16>
    %cst_17 = arith.constant dense<0.000000e+00> : vector<64x128xf32>
    %37 = tpu.matmul %36, %35, %cst_17 {dimension_numbers = #tpu.dot_dimension_numbers<[1], [0], [0], [1], [0, 0, 1, 1], [], []>} : vector<64x128xbf16>, vector<128x128xbf16>, vector<64x128xf32> -> vector<64x128xf32>
    %38 = vector.extract_strided_slice %0 {offsets = [3, 0], sizes = [1, 128], strides = [1, 1]} : vector<6x128xf32> to vector<1x128xf32>
    %39 = vector.shape_cast %38 : vector<1x128xf32> to vector<128xf32>
    %40 = vector.shape_cast %39 : vector<128xf32> to vector<1x128xf32>
    %41 = vector.broadcast %40 : vector<1x128xf32> to vector<64x128xf32>
    %42 = arith.addf %37, %41 : vector<64x128xf32>
    %cst_18 = arith.constant 0.000000e+00 : f32
    %43 = vector.broadcast %cst_18 : f32 to vector<64x128xf32>
    %44 = arith.maximumf %42, %43 : vector<64x128xf32>
    %c4 = arith.constant 4 : index
    %c0_19 = arith.constant 0 : index
    %c0_20 = arith.constant 0 : index
    %45 = vector.load %arg2[%c4, %c0_19, %c0_20] : memref<6x128x128xbf16, #tpu.memory_space<vmem>>, vector<1x128x128xbf16>
    %46 = vector.shape_cast %45 : vector<1x128x128xbf16> to vector<128x128xbf16>
    %47 = arith.truncf %44 : vector<64x128xf32> to vector<64x128xbf16>
    %cst_21 = arith.constant dense<0.000000e+00> : vector<64x128xf32>
    %48 = tpu.matmul %47, %46, %cst_21 {dimension_numbers = #tpu.dot_dimension_numbers<[1], [0], [0], [1], [0, 0, 1, 1], [], []>} : vector<64x128xbf16>, vector<128x128xbf16>, vector<64x128xf32> -> vector<64x128xf32>
    %49 = vector.extract_strided_slice %0 {offsets = [4, 0], sizes = [1, 128], strides = [1, 1]} : vector<6x128xf32> to vector<1x128xf32>
    %50 = vector.shape_cast %49 : vector<1x128xf32> to vector<128xf32>
    %51 = vector.shape_cast %50 : vector<128xf32> to vector<1x128xf32>
    %52 = vector.broadcast %51 : vector<1x128xf32> to vector<64x128xf32>
    %53 = arith.addf %48, %52 : vector<64x128xf32>
    %cst_22 = arith.constant 0.000000e+00 : f32
    %54 = vector.broadcast %cst_22 : f32 to vector<64x128xf32>
    %55 = arith.maximumf %53, %54 : vector<64x128xf32>
    %c5 = arith.constant 5 : index
    %c0_23 = arith.constant 0 : index
    %c0_24 = arith.constant 0 : index
    %56 = vector.load %arg2[%c5, %c0_23, %c0_24] : memref<6x128x128xbf16, #tpu.memory_space<vmem>>, vector<1x128x128xbf16>
    %57 = vector.shape_cast %56 : vector<1x128x128xbf16> to vector<128x128xbf16>
    %58 = arith.truncf %55 : vector<64x128xf32> to vector<64x128xbf16>
    %cst_25 = arith.constant dense<0.000000e+00> : vector<64x128xf32>
    %59 = tpu.matmul %58, %57, %cst_25 {dimension_numbers = #tpu.dot_dimension_numbers<[1], [0], [0], [1], [0, 0, 1, 1], [], []>} : vector<64x128xbf16>, vector<128x128xbf16>, vector<64x128xf32> -> vector<64x128xf32>
    %60 = vector.extract_strided_slice %0 {offsets = [5, 0], sizes = [1, 128], strides = [1, 1]} : vector<6x128xf32> to vector<1x128xf32>
    %61 = vector.shape_cast %60 : vector<1x128xf32> to vector<128xf32>
    %62 = vector.shape_cast %61 : vector<128xf32> to vector<1x128xf32>
    %63 = vector.broadcast %62 : vector<1x128xf32> to vector<64x128xf32>
    %64 = arith.addf %59, %63 : vector<64x128xf32>
    %c0_26 = arith.constant 0 : index
    %c0_27 = arith.constant 0 : index
    %65 = vector.load %arg4[%c0_26, %c0_27] : memref<64x128xf32, #tpu.memory_space<vmem>>, vector<64x128xf32>
    tpu.vector_store %arg4[%c0_26, %c0_27], %64 {strides = array<i32>} : memref<64x128xf32, #tpu.memory_space<vmem>>, vector<64x128xf32>,
    return
  }
  func.func @transform_0(%arg0: i32) -> (i32, i32) {
    %c0_i32 = arith.constant 0 : i32
    %c0_i32_0 = arith.constant 0 : i32
    return %arg0, %c0_i32 : i32, i32
  }
  func.func @transform_1(%arg0: i32) -> (i32, i32, i32) {
    %c0_i32 = arith.constant 0 : i32
    %c0_i32_0 = arith.constant 0 : i32
    %c0_i32_1 = arith.constant 0 : i32
    %c0_i32_2 = arith.constant 0 : i32
    return %c0_i32, %c0_i32_0, %c0_i32_1 : i32, i32, i32
  }
  func.func @transform_2(%arg0: i32) -> (i32, i32) {
    %c0_i32 = arith.constant 0 : i32
    %c0_i32_0 = arith.constant 0 : i32
    %c0_i32_1 = arith.constant 0 : i32
    return %c0_i32, %c0_i32_0 : i32, i32
  }
  func.func @transform_3(%arg0: i32) -> (i32, i32) {
    %c0_i32 = arith.constant 0 : i32
    %c0_i32_0 = arith.constant 0 : i32
    return %arg0, %c0_i32 : i32, i32
  }
}

module attributes {stable_mosaic.version = 11 : i64} {
  func.func @_autoencoder_kernel(%arg0: i32, %arg1: memref<64x128xbf16, #tpu.memory_space<vmem>>, %arg2: memref<6x128x128xbf16, #tpu.memory_space<vmem>>, %arg3: memref<6x128xf32, #tpu.memory_space<vmem>>, %arg4: memref<64x128xf32, #tpu.memory_space<vmem>>) attributes {dimension_semantics = [#tpu.dimension_semantics<parallel>], iteration_bounds = array<i64: 1>, scalar_prefetch = 0 : i64, scratch_operands = 0 : i64, tpu.core_type = #tpu.core_type<tc>, window_params = [{transform_indices = @transform_0, window_bounds = array<i64: 64, 128>}, {pipeline_mode = #tpu.pipeline_mode<synchronous>, transform_indices = @transform_1, window_bounds = array<i64: 6, 128, 128>}, {pipeline_mode = #tpu.pipeline_mode<synchronous>, transform_indices = @transform_2, window_bounds = array<i64: 6, 128>}, {transform_indices = @transform_3, window_bounds = array<i64: 64, 128>}]} {
    %c0 = arith.constant 0 : index
    %c0_0 = arith.constant 0 : index
    %0 = vector.load %arg3[%c0, %c0_0] : memref<6x128xf32, #tpu.memory_space<vmem>>, vector<6x128xf32>
    %c0_1 = arith.constant 0 : index
    %c0_2 = arith.constant 0 : index
    %1 = vector.load %arg1[%c0_1, %c0_2] : memref<64x128xbf16, #tpu.memory_space<vmem>>, vector<64x128xbf16>
    %c0_3 = arith.constant 0 : index
    %c0_4 = arith.constant 0 : index
    %c0_5 = arith.constant 0 : index
    %2 = vector.load %arg2[%c0_3, %c0_4, %c0_5] : memref<6x128x128xbf16, #tpu.memory_space<vmem>>, vector<1x128x128xbf16>
    %3 = vector.shape_cast %2 : vector<1x128x128xbf16> to vector<128x128xbf16>
    %cst = arith.constant dense<0.000000e+00> : vector<64x128xf32>
    %4 = tpu.matmul %1, %3, %cst {dimension_numbers = #tpu.dot_dimension_numbers<[1], [0], [0], [1], [0, 0, 1, 1], [], []>} : vector<64x128xbf16>, vector<128x128xbf16>, vector<64x128xf32> -> vector<64x128xf32>
    %5 = vector.extract_strided_slice %0 {offsets = [0, 0], sizes = [1, 128], strides = [1, 1]} : vector<6x128xf32> to vector<1x128xf32>
    %6 = vector.shape_cast %5 : vector<1x128xf32> to vector<128xf32>
    %7 = vector.shape_cast %6 : vector<128xf32> to vector<1x128xf32>
    %8 = vector.broadcast %7 : vector<1x128xf32> to vector<64x128xf32>
    %9 = arith.addf %4, %8 : vector<64x128xf32>
    %cst_6 = arith.constant 0.000000e+00 : f32
    %10 = vector.broadcast %cst_6 : f32 to vector<64x128xf32>
    %11 = arith.maximumf %9, %10 : vector<64x128xf32>
    %c1 = arith.constant 1 : index
    %c0_7 = arith.constant 0 : index
    %c0_8 = arith.constant 0 : index
    %12 = vector.load %arg2[%c1, %c0_7, %c0_8] : memref<6x128x128xbf16, #tpu.memory_space<vmem>>, vector<1x128x128xbf16>
    %13 = vector.shape_cast %12 : vector<1x128x128xbf16> to vector<128x128xbf16>
    %14 = arith.truncf %11 : vector<64x128xf32> to vector<64x128xbf16>
    %cst_9 = arith.constant dense<0.000000e+00> : vector<64x128xf32>
    %15 = tpu.matmul %14, %13, %cst_9 {dimension_numbers = #tpu.dot_dimension_numbers<[1], [0], [0], [1], [0, 0, 1, 1], [], []>} : vector<64x128xbf16>, vector<128x128xbf16>, vector<64x128xf32> -> vector<64x128xf32>
    %16 = vector.extract_strided_slice %0 {offsets = [1, 0], sizes = [1, 128], strides = [1, 1]} : vector<6x128xf32> to vector<1x128xf32>
    %17 = vector.shape_cast %16 : vector<1x128xf32> to vector<128xf32>
    %18 = vector.shape_cast %17 : vector<128xf32> to vector<1x128xf32>
    %19 = vector.broadcast %18 : vector<1x128xf32> to vector<64x128xf32>
    %20 = arith.addf %15, %19 : vector<64x128xf32>
    %cst_10 = arith.constant 0.000000e+00 : f32
    %21 = vector.broadcast %cst_10 : f32 to vector<64x128xf32>
    %22 = arith.maximumf %20, %21 : vector<64x128xf32>
    %c2 = arith.constant 2 : index
    %c0_11 = arith.constant 0 : index
    %c0_12 = arith.constant 0 : index
    %23 = vector.load %arg2[%c2, %c0_11, %c0_12] : memref<6x128x128xbf16, #tpu.memory_space<vmem>>, vector<1x128x128xbf16>
    %24 = vector.shape_cast %23 : vector<1x128x128xbf16> to vector<128x128xbf16>
    %25 = arith.truncf %22 : vector<64x128xf32> to vector<64x128xbf16>
    %cst_13 = arith.constant dense<0.000000e+00> : vector<64x128xf32>
    %26 = tpu.matmul %25, %24, %cst_13 {dimension_numbers = #tpu.dot_dimension_numbers<[1], [0], [0], [1], [0, 0, 1, 1], [], []>} : vector<64x128xbf16>, vector<128x128xbf16>, vector<64x128xf32> -> vector<64x128xf32>
    %27 = vector.extract_strided_slice %0 {offsets = [2, 0], sizes = [1, 128], strides = [1, 1]} : vector<6x128xf32> to vector<1x128xf32>
    %28 = vector.shape_cast %27 : vector<1x128xf32> to vector<128xf32>
    %29 = vector.shape_cast %28 : vector<128xf32> to vector<1x128xf32>
    %30 = vector.broadcast %29 : vector<1x128xf32> to vector<64x128xf32>
    %31 = arith.addf %26, %30 : vector<64x128xf32>
    %cst_14 = arith.constant 0.000000e+00 : f32
    %32 = vector.broadcast %cst_14 : f32 to vector<64x128xf32>
    %33 = arith.maximumf %31, %32 : vector<64x128xf32>
    %c3 = arith.constant 3 : index
    %c0_15 = arith.constant 0 : index
    %c0_16 = arith.constant 0 : index
    %34 = vector.load %arg2[%c3, %c0_15, %c0_16] : memref<6x128x128xbf16, #tpu.memory_space<vmem>>, vector<1x128x128xbf16>
    %35 = vector.shape_cast %34 : vector<1x128x128xbf16> to vector<128x128xbf16>
    %36 = arith.truncf %33 : vector<64x128xf32> to vector<64x128xbf16>
    %cst_17 = arith.constant dense<0.000000e+00> : vector<64x128xf32>
    %37 = tpu.matmul %36, %35, %cst_17 {dimension_numbers = #tpu.dot_dimension_numbers<[1], [0], [0], [1], [0, 0, 1, 1], [], []>} : vector<64x128xbf16>, vector<128x128xbf16>, vector<64x128xf32> -> vector<64x128xf32>
    %38 = vector.extract_strided_slice %0 {offsets = [3, 0], sizes = [1, 128], strides = [1, 1]} : vector<6x128xf32> to vector<1x128xf32>
    %39 = vector.shape_cast %38 : vector<1x128xf32> to vector<128xf32>
    %40 = vector.shape_cast %39 : vector<128xf32> to vector<1x128xf32>
    %41 = vector.broadcast %40 : vector<1x128xf32> to vector<64x128xf32>
    %42 = arith.addf %37, %41 : vector<64x128xf32>
    %cst_18 = arith.constant 0.000000e+00 : f32
    %43 = vector.broadcast %cst_18 : f32 to vector<64x128xf32>
    %44 = arith.maximumf %42, %43 : vector<64x128xf32>
    %c4 = arith.constant 4 : index
    %c0_19 = arith.constant 0 : index
    %c0_20 = arith.constant 0 : index
    %45 = vector.load %arg2[%c4, %c0_19, %c0_20] : memref<6x128x128xbf16, #tpu.memory_space<vmem>>, vector<1x128x128xbf16>
    %46 = vector.shape_cast %45 : vector<1x128x128xbf16> to vector<128x128xbf16>
    %47 = arith.truncf %44 : vector<64x128xf32> to vector<64x128xbf16>
    %cst_21 = arith.constant dense<0.000000e+00> : vector<64x128xf32>
    %48 = tpu.matmul %47, %46, %cst_21 {dimension_numbers = #tpu.dot_dimension_numbers<[1], [0], [0], [1], [0, 0, 1, 1], [], []>} : vector<64x128xbf16>, vector<128x128xbf16>, vector<64x128xf32> -> vector<64x128xf32>
    %49 = vector.extract_strided_slice %0 {offsets = [4, 0], sizes = [1, 128], strides = [1, 1]} : vector<6x128xf32> to vector<1x128xf32>
    %50 = vector.shape_cast %49 : vector<1x128xf32> to vector<128xf32>
    %51 = vector.shape_cast %50 : vector<128xf32> to vector<1x128xf32>
    %52 = vector.broadcast %51 : vector<1x128xf32> to vector<64x128xf32>
    %53 = arith.addf %48, %52 : vector<64x128xf32>
    %cst_22 = arith.constant 0.000000e+00 : f32
    %54 = vector.broadcast %cst_22 : f32 to vector<64x128xf32>
    %55 = arith.maximumf %53, %54 : vector<64x128xf32>
    %c5 = arith.constant 5 : index
    %c0_23 = arith.constant 0 : index
    %c0_24 = arith.constant 0 : index
    %56 = vector.load %arg2[%c5, %c0_23, %c0_24] : memref<6x128x128xbf16, #tpu.memory_space<vmem>>, vector<1x128x128xbf16>
    %57 = vector.shape_cast %56 : vector<1x128x128xbf16> to vector<128x128xbf16>
    %58 = arith.truncf %55 : vector<64x128xf32> to vector<64x128xbf16>
    %cst_25 = arith.constant dense<0.000000e+00> : vector<64x128xf32>
    %59 = tpu.matmul %58, %57, %cst_25 {dimension_numbers = #tpu.dot_dimension_numbers<[1], [0], [0], [1], [0, 0, 1, 1], [], []>} : vector<64x128xbf16>, vector<128x128xbf16>, vector<64x128xf32> -> vector<64x128xf32>
    %60 = vector.extract_strided_slice %0 {offsets = [5, 0], sizes = [1, 128], strides = [1, 1]} : vector<6x128xf32> to vector<1x128xf32>
    %61 = vector.shape_cast %60 : vector<1x128xf32> to vector<128xf32>
    %62 = vector.shape_cast %61 : vector<128xf32> to vector<1x128xf32>
    %63 = vector.broadcast %62 : vector<1x128xf32> to vector<64x128xf32>
    %64 = arith.addf %59, %63 : vector<64x128xf32>
    %c0_26 = arith.constant 0 : index
    %c0_27 = arith.constant 0 : index
    %65 = vector.load %arg4[%c0_26, %c0_27] : memref<64x128xf32, #tpu.memory_space<vmem>>, vector<64x128xf32>
    tpu.vector_store %arg4[%c0_26, %c0_27], %64 {strides = array<i32>} : memref<64x128xf32, #tpu.memory_space<vmem>>, vector<64x128xf32>,
    return
  }
  func.func @transform_0(%arg0: i32) -> (i32, i32) {
    %c0_i32 = arith.constant 0 : i32
    %c0_i32_0 = arith.constant 0 : i32
    return %arg0, %c0_i32 : i32, i32
  }
  func.func @transform_1(%arg0: i32) -> (i32, i32, i32) {
    %c0_i32 = arith.constant 0 : i32
    %c0_i32_0 = arith.constant 0 : i32
    %c0_i32_1 = arith.constant 0 : i32
    %c0_i32_2 = arith.constant 0 : i32
    return %c0_i32, %c0_i32_0, %c0_i32_1 : i32, i32, i32
  }
  func.func @transform_2(%arg0: i32) -> (i32, i32) {
    %c0_i32 = arith.constant 0 : i32
    %c0_i32_0 = arith.constant 0 : i32
    %c0_i32_1 = arith.constant 0 : i32
    return %c0_i32, %c0_i32_0 : i32, i32
  }
  func.func @transform_3(%arg0: i32) -> (i32, i32) {
    %c0_i32 = arith.constant 0 : i32
    %c0_i32_0 = arith.constant 0 : i32
    return %arg0, %c0_i32 : i32, i32
  }
}

</mosaic_0001>

<llo_original>
// kernel: tpu_custom_call.1
$region0: #{tpu_custom_call.1}
  #allocation0 [shape = 'u32[]', space=smem, size = 0x4, offset = 0x4, fixed_abs, tag = 'smem constant byte address 0x4 - core index']
  #allocation1 [shape = 'u32[144,128]{1,0:T(1,128)}', space=vmem, size = 0x12000, scoped, tag = 'internal scratch']
  %s0 = inlined_call_operand.hbm [shape: bf16[64,128], index: 0, kind: input, shape index: {}]
  %s1 = inlined_call_operand.hbm [shape: bf16[6,128,128], index: 1, kind: input, shape index: {}]
  %s2 = inlined_call_operand.hbm [shape: f32[6,128], index: 2, kind: input, shape index: {}]
  %s3 = inlined_call_operand.hbm [shape: f32[64,128], index: 3, kind: output, shape index: {}]
  %s4 = sld [smem:[#allocation0]]
  $region34: #{tpu_custom_call.1} parent=0
    _
  %s6 = ssub.s32 1, %s4
  %s7 = scalar_select 0, %s6, %s4
  $region1: #{tpu_custom_call.1} parent=0
    #allocation2 [shape = 'u8[16384]{0}', space=vmem, size = 0x4000, scoped, tag = 'input window, operand 0, single buffered']
    #allocation3 [shape = 's32[1]{0}', space=sflag, size = 0x4, scoped, tag = 'scoped memory for tpu_custom_call.1']
    #allocation4 [shape = 's32[1]{0}', space=sflag, size = 0x4, scoped, tag = 'scoped memory for tpu_custom_call.1']
    #allocation5 [shape = 'u8[196608]{0}', space=vmem, size = 0x30000, scoped, tag = 'input window, operand 1, single buffered']
    #allocation6 [shape = 's32[1]{0}', space=sflag, size = 0x4, scoped, tag = 'scoped memory for tpu_custom_call.1']
    #allocation7 [shape = 'u8[4096]{0}', space=vmem, size = 0x1000, scoped, tag = 'input window, operand 2, single buffered']
    #allocation8 [shape = 'u8[32768]{0}', space=vmem, size = 0x8000, scoped, tag = 'output window, operand 0, single buffered']
    %8 = vsyncpa [#allocation3], 0
    %9 = vsyncpa [#allocation6], 0
    %10 = vsyncpa [#allocation4], 0
    // Predicated region
    $region2: #{tpu_custom_call.1} parent=1 // pred_check
      _
    $region3: #{tpu_custom_call.1} parent=1 // pred_check_branch
      %12 = sbr.rel (0) target = $region5
    $region4: #{tpu_custom_call.1} parent=1 // pred_region
      %s14 = ssub.s32 512, 512
      %15 = vsyncadd [#allocation3], %s14
      %s16 = sshll.u32 [#allocation2], 4
      %s17 = int_to_ptr.vmem [resolvable:$true] %s16
      %22 = dma.hbm_to_vmem [thread:$0]  %s0, 512, %s17, [#allocation3], 64, 64, 4
    $region5: #{tpu_custom_call.1} parent=1 // pred_fallthru
      _
    // Predicated region
    $region6: #{tpu_custom_call.1} parent=1 // pred_check
      _
    $region7: #{tpu_custom_call.1} parent=1 // pred_check_branch
      %24 = sbr.rel (0) target = $region9
    $region8: #{tpu_custom_call.1} parent=1 // pred_region
      %s26 = ssub.s32 6144, 6144
      %27 = vsyncadd [#allocation6], %s26
      %s28 = sshll.u32 [#allocation5], 4
      %s29 = int_to_ptr.vmem [resolvable:$true] %s28
      %34 = dma.hbm_to_vmem [thread:$0]  %s1, 6144, %s29, [#allocation6], 64, 64, 4
    $region9: #{tpu_custom_call.1} parent=1 // pred_fallthru
      _
    // Predicated region
    $region10: #{tpu_custom_call.1} parent=1 // pred_check
      _
    $region11: #{tpu_custom_call.1} parent=1 // pred_check_branch
      %36 = sbr.rel (0) target = $region13
    $region12: #{tpu_custom_call.1} parent=1 // pred_region
      %s38 = ssub.s32 128, 128
      %39 = vsyncadd [#allocation6], %s38
      %s41 = sshll.u32 [#allocation7], 4
      %s42 = int_to_ptr.vmem [resolvable:$true] %s41
      %44 = dma.hbm_to_vmem [thread:$0]  %s2, 128, %s42, [#allocation6]
    $region13: #{tpu_custom_call.1} parent=1 // pred_fallthru
      _
    // Predicated region
    $region14: #{tpu_custom_call.1} parent=1 // pred_check
      _
    $region15: #{tpu_custom_call.1} parent=1 // pred_check_branch
      %46 = sbr.rel (0) target = $region17
    $region16: #{tpu_custom_call.1} parent=1 // pred_region
      %47 = dma.done [#allocation3], 512
    $region17: #{tpu_custom_call.1} parent=1 // pred_fallthru
      _
    // Predicated region
    $region18: #{tpu_custom_call.1} parent=1 // pred_check
      _
    $region19: #{tpu_custom_call.1} parent=1 // pred_check_branch
      %49 = sbr.rel (0) target = $region21
    $region20: #{tpu_custom_call.1} parent=1 // pred_region
      %50 = dma.done [#allocation6], 6144
    $region21: #{tpu_custom_call.1} parent=1 // pred_fallthru
      _
    // Predicated region
    $region22: #{tpu_custom_call.1} parent=1 // pred_check
      _
    $region23: #{tpu_custom_call.1} parent=1 // pred_check_branch
      %52 = sbr.rel (0) target = $region25
    $region24: #{tpu_custom_call.1} parent=1 // pred_region
      %53 = dma.done [#allocation6], 128
    $region25: #{tpu_custom_call.1} parent=1 // pred_fallthru
      _
    %v55 = vld [vmem:[#allocation7] sm:$0x3f]
    %v56 = vld [vmem:[#allocation2] sm:$0xf]
    %v57 = vld [vmem:[#allocation2 + $0x4] sm:$0xf]
    %v58 = vld [vmem:[#allocation2 + $0x8] sm:$0xf]
    %v59 = vld [vmem:[#allocation2 + $0xc] sm:$0xf]
    %v60 = vld [vmem:[#allocation2 + $0x10] sm:$0xf]
    %v61 = vld [vmem:[#allocation2 + $0x14] sm:$0xf]
    %v62 = vld [vmem:[#allocation2 + $0x18] sm:$0xf]
    %v63 = vld [vmem:[#allocation2 + $0x1c] sm:$0xf]
    %v64 = vld [vmem:[#allocation5] sm:$0xf]
    %v65 = vld [vmem:[#allocation5 + $0x4] sm:$0xf]
    %v66 = vld [vmem:[#allocation5 + $0x8] sm:$0xf]
    %v67 = vld [vmem:[#allocation5 + $0xc] sm:$0xf]
    %v68 = vld [vmem:[#allocation5 + $0x10] sm:$0xf]
    %v69 = vld [vmem:[#allocation5 + $0x14] sm:$0xf]
    %v70 = vld [vmem:[#allocation5 + $0x18] sm:$0xf]
    %v71 = vld [vmem:[#allocation5 + $0x1c] sm:$0xf]
    %v72 = vld [vmem:[#allocation5 + $0x20] sm:$0xf]
    %v73 = vld [vmem:[#allocation5 + $0x24] sm:$0xf]
    %v74 = vld [vmem:[#allocation5 + $0x28] sm:$0xf]
    %v75 = vld [vmem:[#allocation5 + $0x2c] sm:$0xf]
    %v76 = vld [vmem:[#allocation5 + $0x30] sm:$0xf]
    %v77 = vld [vmem:[#allocation5 + $0x34] sm:$0xf]
    %v78 = vld [vmem:[#allocation5 + $0x38] sm:$0xf]
    %v79 = vld [vmem:[#allocation5 + $0x3c] sm:$0xf]
    %v80 = vlaneseq
    %v81 = vshrl.u32 %v80, 7
    %v82 = vsub.s32 0, %v81
    %v83 = vrot.slane %v55, %v82
    %v92 = vunpack.c.l.b16 %v56
    %v93 = vunpack.c.l.b16 %v57
    %v94 = vunpack.c.l.b16 %v58
    %v95 = vunpack.c.l.b16 %v59
    %v96 = vunpack.c.l.b16 %v60
    %v97 = vunpack.c.l.b16 %v61
    %v98 = vunpack.c.l.b16 %v62
    %v99 = vunpack.c.l.b16 %v63
    %v100 = vpack.c.b16 %v93, %v92
    %v101 = vpack.c.b16 %v95, %v94
    %v102 = vpack.c.b16 %v97, %v96
    %v103 = vpack.c.b16 %v99, %v98
    %v124 = vunpack.c.l.b16 %v64
    %v125 = vunpack.c.l.b16 %v65
    %v126 = vunpack.c.l.b16 %v66
    %v127 = vunpack.c.l.b16 %v67
    %v128 = vunpack.c.l.b16 %v68
    %v129 = vunpack.c.l.b16 %v69
    %v130 = vunpack.c.l.b16 %v70
    %v131 = vunpack.c.l.b16 %v71
    %v132 = vunpack.c.l.b16 %v72
    %v133 = vunpack.c.l.b16 %v73
    %v134 = vunpack.c.l.b16 %v74
    %v135 = vunpack.c.l.b16 %v75
    %v136 = vunpack.c.l.b16 %v76
    %v137 = vunpack.c.l.b16 %v77
    %v138 = vunpack.c.l.b16 %v78
    %v139 = vunpack.c.l.b16 %v79
    %v140 = vpack.c.b16 %v125, %v124
    %v141 = vpack.c.b16 %v127, %v126
    %v142 = vpack.c.b16 %v129, %v128
    %v143 = vpack.c.b16 %v131, %v130
    %v144 = vpack.c.b16 %v133, %v132
    %v145 = vpack.c.b16 %v135, %v134
    %v146 = vpack.c.b16 %v137, %v136
    %v147 = vpack.c.b16 %v139, %v138
    %156 = vmatprep.subr.bf16.mxu0 0
    %157 = vmatpush1.bf16.msra.mxu0 %v147
    %158 = vmatprep.subr.bf16.mxu0 0
    %159 = vmatpush1.bf16.msra.mxu0 %v146
    %160 = vmatprep.subr.bf16.mxu0 0
    %161 = vmatpush1.bf16.msra.mxu0 %v145
    %162 = vmatprep.subr.bf16.mxu0 0
    %163 = vmatpush1.bf16.msra.mxu0 %v144
    %164 = vmatprep.subr.bf16.mxu0 0
    %165 = vmatpush1.bf16.msra.mxu0 %v143
    %166 = vmatprep.subr.bf16.mxu0 0
    %167 = vmatpush1.bf16.msra.mxu0 %v142
    %168 = vmatprep.subr.bf16.mxu0 0
    %169 = vmatpush1.bf16.msra.mxu0 %v141
    %170 = vmatprep.subr.bf16.mxu0 0
    %171 = vmatpush1.bf16.msra.mxu0 %v140
    %172 = vmatprep.subr.bf16.mxu0 0
    %173 = vmatpush2.bf16.msra.mxu0 0
    %174 = vmatprep.subr.bf16.mxu0 0
    %175 = vmatpush2.bf16.msra.mxu0 0
    %176 = vmatprep.subr.bf16.mxu0 0
    %177 = vmatpush2.bf16.msra.mxu0 0
    %178 = vmatprep.subr.bf16.mxu0 0
    %179 = vmatpush2.bf16.msra.mxu0 0
    %180 = vmatprep.subr.bf16.mxu0 0
    %181 = vmatpush2.bf16.msra.mxu0 0
    %182 = vmatprep.subr.bf16.mxu0 0
    %183 = vmatpush2.bf16.msra.mxu0 0
    %184 = vmatprep.subr.bf16.mxu0 0
    %185 = vmatpush2.bf16.msra.mxu0 0
    %186 = vmatprep.subr.bf16.mxu0 0
    %187 = vmatpush2.bf16.msra.mxu0 0
    %188 = vmatprep.mubr.bf16.mxu0 0
    %189 = vmatmul.mubr.bf16.gmra.mxu0 %v100
    %v190 = vpop.f32.mrf.mxu0
    %v191 = vadd.f32 %v83, %v190
    %v192 = vpop.f32.mrf.mxu0
    %v193 = vpop.f32.mrf.mxu0
    %v194 = vadd.f32 %v83, %v193
    %v195 = vpop.f32.mrf.mxu0
    %196 = vmatprep.mubr.bf16.mxu0 0
    %197 = vmatmul.mubr.bf16.gmra.mxu0 %v101
    %v198 = vpop.f32.mrf.mxu0
    %v199 = vadd.f32 %v83, %v198
    %v200 = vpop.f32.mrf.mxu0
    %v201 = vpop.f32.mrf.mxu0
    %v202 = vadd.f32 %v83, %v201
    %v203 = vpop.f32.mrf.mxu0
    %204 = vmatprep.mubr.bf16.mxu0 0
    %205 = vmatmul.mubr.bf16.gmra.mxu0 %v102
    %v206 = vpop.f32.mrf.mxu0
    %v207 = vadd.f32 %v83, %v206
    %v208 = vpop.f32.mrf.mxu0
    %v209 = vpop.f32.mrf.mxu0
    %v210 = vadd.f32 %v83, %v209
    %v211 = vpop.f32.mrf.mxu0
    %212 = vmatprep.mubr.bf16.mxu0 0
    %213 = vmatmul.mubr.bf16.gmra.mxu0 %v103
    %v214 = vpop.f32.mrf.mxu0
    %v215 = vadd.f32 %v83, %v214
    %v216 = vpop.f32.mrf.mxu0
    %v217 = vpop.f32.mrf.mxu0
    %v218 = vadd.f32 %v83, %v217
    %v219 = vpop.f32.mrf.mxu0
    %220 = vdwg.mxu0
    %v221 = vmax.f32 %v191, 0.0
    %v222 = vmax.f32 %v194, 0.0
    %v223 = vmax.f32 %v199, 0.0
    %v224 = vmax.f32 %v202, 0.0
    %v225 = vmax.f32 %v207, 0.0
    %v226 = vmax.f32 %v210, 0.0
    %v227 = vmax.f32 %v215, 0.0
    %v228 = vmax.f32 %v218, 0.0
    %s229 = scalar_lea.vmem [#allocation5], 64
    %v230 = vld [vmem:[%s229] sm:$0xf]
    %v231 = vld [vmem:[%s229 + $0x4] sm:$0xf]
    %v232 = vld [vmem:[%s229 + $0x8] sm:$0xf]
    %v233 = vld [vmem:[%s229 + $0xc] sm:$0xf]
    %v234 = vld [vmem:[%s229 + $0x10] sm:$0xf]
    %v235 = vld [vmem:[%s229 + $0x14] sm:$0xf]
    %v236 = vld [vmem:[%s229 + $0x18] sm:$0xf]
    %v237 = vld [vmem:[%s229 + $0x1c] sm:$0xf]
    %v238 = vld [vmem:[%s229 + $0x20] sm:$0xf]
    %v239 = vld [vmem:[%s229 + $0x24] sm:$0xf]
    %v240 = vld [vmem:[%s229 + $0x28] sm:$0xf]
    %v241 = vld [vmem:[%s229 + $0x2c] sm:$0xf]
    %v242 = vld [vmem:[%s229 + $0x30] sm:$0xf]
    %v243 = vld [vmem:[%s229 + $0x34] sm:$0xf]
    %v244 = vld [vmem:[%s229 + $0x38] sm:$0xf]
    %v245 = vld [vmem:[%s229 + $0x3c] sm:$0xf]
    %v246 = vpack.c.bf16 %v222, %v221
    %v247 = vpack.c.bf16 %v224, %v223
    %v248 = vpack.c.bf16 %v226, %v225
    %v249 = vpack.c.bf16 %v228, %v227
    %v250 = vlaneseq
    %v251 = vshrl.u32 %v250, 7
    %v252 = vsub.s32 1, %v251
    %v253 = vrot.slane %v55, %v252
    %v270 = vunpack.c.l.b16 %v230
    %v271 = vunpack.c.l.b16 %v231
    %v272 = vunpack.c.l.b16 %v232
    %v273 = vunpack.c.l.b16 %v233
    %v274 = vunpack.c.l.b16 %v234
    %v275 = vunpack.c.l.b16 %v235
    %v276 = vunpack.c.l.b16 %v236
    %v277 = vunpack.c.l.b16 %v237
    %v278 = vunpack.c.l.b16 %v238
    %v279 = vunpack.c.l.b16 %v239
    %v280 = vunpack.c.l.b16 %v240
    %v281 = vunpack.c.l.b16 %v241
    %v282 = vunpack.c.l.b16 %v242
    %v283 = vunpack.c.l.b16 %v243
    %v284 = vunpack.c.l.b16 %v244
    %v285 = vunpack.c.l.b16 %v245
    %v286 = vpack.c.b16 %v271, %v270
    %v287 = vpack.c.b16 %v273, %v272
    %v288 = vpack.c.b16 %v275, %v274
    %v289 = vpack.c.b16 %v277, %v276
    %v290 = vpack.c.b16 %v279, %v278
    %v291 = vpack.c.b16 %v281, %v280
    %v292 = vpack.c.b16 %v283, %v282
    %v293 = vpack.c.b16 %v285, %v284
    %302 = vmatprep.subr.bf16.mxu0 0
    %303 = vmatpush1.bf16.msra.mxu0 %v293
    %304 = vmatprep.subr.bf16.mxu0 0
    %305 = vmatpush1.bf16.msra.mxu0 %v292
    %306 = vmatprep.subr.bf16.mxu0 0
    %307 = vmatpush1.bf16.msra.mxu0 %v291
    %308 = vmatprep.subr.bf16.mxu0 0
    %309 = vmatpush1.bf16.msra.mxu0 %v290
    %310 = vmatprep.subr.bf16.mxu0 0
    %311 = vmatpush1.bf16.msra.mxu0 %v289
    %312 = vmatprep.subr.bf16.mxu0 0
    %313 = vmatpush1.bf16.msra.mxu0 %v288
    %314 = vmatprep.subr.bf16.mxu0 0
    %315 = vmatpush1.bf16.msra.mxu0 %v287
    %316 = vmatprep.subr.bf16.mxu0 0
    %317 = vmatpush1.bf16.msra.mxu0 %v286
    %318 = vmatprep.subr.bf16.mxu0 0
    %319 = vmatpush2.bf16.msra.mxu0 0
    %320 = vmatprep.subr.bf16.mxu0 0
    %321 = vmatpush2.bf16.msra.mxu0 0
    %322 = vmatprep.subr.bf16.mxu0 0
    %323 = vmatpush2.bf16.msra.mxu0 0
    %324 = vmatprep.subr.bf16.mxu0 0
    %325 = vmatpush2.bf16.msra.mxu0 0
    %326 = vmatprep.subr.bf16.mxu0 0
    %327 = vmatpush2.bf16.msra.mxu0 0
    %328 = vmatprep.subr.bf16.mxu0 0
    %329 = vmatpush2.bf16.msra.mxu0 0
    %330 = vmatprep.subr.bf16.mxu0 0
    %331 = vmatpush2.bf16.msra.mxu0 0
    %332 = vmatprep.subr.bf16.mxu0 0
    %333 = vmatpush2.bf16.msra.mxu0 0
    %334 = vmatprep.mubr.bf16.mxu0 0
    %335 = vmatmul.mubr.bf16.gmra.mxu0 %v246
    %v336 = vpop.f32.mrf.mxu0
    %v337 = vadd.f32 %v253, %v336
    %v338 = vpop.f32.mrf.mxu0
    %v339 = vpop.f32.mrf.mxu0
    %v340 = vadd.f32 %v253, %v339
    %v341 = vpop.f32.mrf.mxu0
    %342 = vmatprep.mubr.bf16.mxu0 0
    %343 = vmatmul.mubr.bf16.gmra.mxu0 %v247
    %v344 = vpop.f32.mrf.mxu0
    %v345 = vadd.f32 %v253, %v344
    %v346 = vpop.f32.mrf.mxu0
    %v347 = vpop.f32.mrf.mxu0
    %v348 = vadd.f32 %v253, %v347
    %v349 = vpop.f32.mrf.mxu0
    %350 = vmatprep.mubr.bf16.mxu0 0
    %351 = vmatmul.mubr.bf16.gmra.mxu0 %v248
    %v352 = vpop.f32.mrf.mxu0
    %v353 = vadd.f32 %v253, %v352
    %v354 = vpop.f32.mrf.mxu0
    %v355 = vpop.f32.mrf.mxu0
    %v356 = vadd.f32 %v253, %v355
    %v357 = vpop.f32.mrf.mxu0
    %358 = vmatprep.mubr.bf16.mxu0 0
    %359 = vmatmul.mubr.bf16.gmra.mxu0 %v249
    %v360 = vpop.f32.mrf.mxu0
    %v361 = vadd.f32 %v253, %v360
    %v362 = vpop.f32.mrf.mxu0
    %v363 = vpop.f32.mrf.mxu0
    %v364 = vadd.f32 %v253, %v363
    %v365 = vpop.f32.mrf.mxu0
    %366 = vdwg.mxu0
    %v367 = vmax.f32 %v337, 0.0
    %v368 = vmax.f32 %v340, 0.0
    %v369 = vmax.f32 %v345, 0.0
    %v370 = vmax.f32 %v348, 0.0
    %v371 = vmax.f32 %v353, 0.0
    %v372 = vmax.f32 %v356, 0.0
    %v373 = vmax.f32 %v361, 0.0
    %v374 = vmax.f32 %v364, 0.0
    %s375 = scalar_lea.vmem [#allocation5], 128
    %v376 = vld [vmem:[%s375] sm:$0xf]
    %v377 = vld [vmem:[%s375 + $0x4] sm:$0xf]
    %v378 = vld [vmem:[%s375 + $0x8] sm:$0xf]
    %v379 = vld [vmem:[%s375 + $0xc] sm:$0xf]
    %v380 = vld [vmem:[%s375 + $0x10] sm:$0xf]
    %v381 = vld [vmem:[%s375 + $0x14] sm:$0xf]
    %v382 = vld [vmem:[%s375 + $0x18] sm:$0xf]
    %v383 = vld [vmem:[%s375 + $0x1c] sm:$0xf]
    %v384 = vld [vmem:[%s375 + $0x20] sm:$0xf]
    %v385 = vld [vmem:[%s375 + $0x24] sm:$0xf]
    %v386 = vld [vmem:[%s375 + $0x28] sm:$0xf]
    %v387 = vld [vmem:[%s375 + $0x2c] sm:$0xf]
    %v388 = vld [vmem:[%s375 + $0x30] sm:$0xf]
    %v389 = vld [vmem:[%s375 + $0x34] sm:$0xf]
    %v390 = vld [vmem:[%s375 + $0x38] sm:$0xf]
    %v391 = vld [vmem:[%s375 + $0x3c] sm:$0xf]
    %v392 = vpack.c.bf16 %v368, %v367
    %v393 = vpack.c.bf16 %v370, %v369
    %v394 = vpack.c.bf16 %v372, %v371
    %v395 = vpack.c.bf16 %v374, %v373
    %v396 = vlaneseq
    %v397 = vshrl.u32 %v396, 7
    %v398 = vsub.s32 2, %v397
    %v399 = vrot.slane %v55, %v398
    %v416 = vunpack.c.l.b16 %v376
    %v417 = vunpack.c.l.b16 %v377
    %v418 = vunpack.c.l.b16 %v378
    %v419 = vunpack.c.l.b16 %v379
    %v420 = vunpack.c.l.b16 %v380
    %v421 = vunpack.c.l.b16 %v381
    %v422 = vunpack.c.l.b16 %v382
    %v423 = vunpack.c.l.b16 %v383
    %v424 = vunpack.c.l.b16 %v384
    %v425 = vunpack.c.l.b16 %v385
    %v426 = vunpack.c.l.b16 %v386
    %v427 = vunpack.c.l.b16 %v387
    %v428 = vunpack.c.l.b16 %v388
    %v429 = vunpack.c.l.b16 %v389
    %v430 = vunpack.c.l.b16 %v390
    %v431 = vunpack.c.l.b16 %v391
    %v432 = vpack.c.b16 %v417, %v416
    %v433 = vpack.c.b16 %v419, %v418
    %v434 = vpack.c.b16 %v421, %v420
    %v435 = vpack.c.b16 %v423, %v422
    %v436 = vpack.c.b16 %v425, %v424
    %v437 = vpack.c.b16 %v427, %v426
    %v438 = vpack.c.b16 %v429, %v428
    %v439 = vpack.c.b16 %v431, %v430
    %448 = vmatprep.subr.bf16.mxu0 0
    %449 = vmatpush1.bf16.msra.mxu0 %v439
    %450 = vmatprep.subr.bf16.mxu0 0
    %451 = vmatpush1.bf16.msra.mxu0 %v438
    %452 = vmatprep.subr.bf16.mxu0 0
    %453 = vmatpush1.bf16.msra.mxu0 %v437
    %454 = vmatprep.subr.bf16.mxu0 0
    %455 = vmatpush1.bf16.msra.mxu0 %v436
    %456 = vmatprep.subr.bf16.mxu0 0
    %457 = vmatpush1.bf16.msra.mxu0 %v435
    %458 = vmatprep.subr.bf16.mxu0 0
    %459 = vmatpush1.bf16.msra.mxu0 %v434
    %460 = vmatprep.subr.bf16.mxu0 0
    %461 = vmatpush1.bf16.msra.mxu0 %v433
    %462 = vmatprep.subr.bf16.mxu0 0
    %463 = vmatpush1.bf16.msra.mxu0 %v432
    %464 = vmatprep.subr.bf16.mxu0 0
    %465 = vmatpush2.bf16.msra.mxu0 0
    %466 = vmatprep.subr.bf16.mxu0 0
    %467 = vmatpush2.bf16.msra.mxu0 0
    %468 = vmatprep.subr.bf16.mxu0 0
    %469 = vmatpush2.bf16.msra.mxu0 0
    %470 = vmatprep.subr.bf16.mxu0 0
    %471 = vmatpush2.bf16.msra.mxu0 0
    %472 = vmatprep.subr.bf16.mxu0 0
    %473 = vmatpush2.bf16.msra.mxu0 0
    %474 = vmatprep.subr.bf16.mxu0 0
    %475 = vmatpush2.bf16.msra.mxu0 0
    %476 = vmatprep.subr.bf16.mxu0 0
    %477 = vmatpush2.bf16.msra.mxu0 0
    %478 = vmatprep.subr.bf16.mxu0 0
    %479 = vmatpush2.bf16.msra.mxu0 0
    %480 = vmatprep.mubr.bf16.mxu0 0
    %481 = vmatmul.mubr.bf16.gmra.mxu0 %v392
    %v482 = vpop.f32.mrf.mxu0
    %v483 = vadd.f32 %v399, %v482
    %v484 = vpop.f32.mrf.mxu0
    %v485 = vpop.f32.mrf.mxu0
    %v486 = vadd.f32 %v399, %v485
    %v487 = vpop.f32.mrf.mxu0
    %488 = vmatprep.mubr.bf16.mxu0 0
    %489 = vmatmul.mubr.bf16.gmra.mxu0 %v393
    %v490 = vpop.f32.mrf.mxu0
    %v491 = vadd.f32 %v399, %v490
    %v492 = vpop.f32.mrf.mxu0
    %v493 = vpop.f32.mrf.mxu0
    %v494 = vadd.f32 %v399, %v493
    %v495 = vpop.f32.mrf.mxu0
    %496 = vmatprep.mubr.bf16.mxu0 0
    %497 = vmatmul.mubr.bf16.gmra.mxu0 %v394
    %v498 = vpop.f32.mrf.mxu0
    %v499 = vadd.f32 %v399, %v498
    %v500 = vpop.f32.mrf.mxu0
    %v501 = vpop.f32.mrf.mxu0
    %v502 = vadd.f32 %v399, %v501
    %v503 = vpop.f32.mrf.mxu0
    %504 = vmatprep.mubr.bf16.mxu0 0
    %505 = vmatmul.mubr.bf16.gmra.mxu0 %v395
    %v506 = vpop.f32.mrf.mxu0
    %v507 = vadd.f32 %v399, %v506
    %v508 = vpop.f32.mrf.mxu0
    %v509 = vpop.f32.mrf.mxu0
    %v510 = vadd.f32 %v399, %v509
    %v511 = vpop.f32.mrf.mxu0
    %512 = vdwg.mxu0
    %v513 = vmax.f32 %v483, 0.0
    %v514 = vmax.f32 %v486, 0.0
    %v515 = vmax.f32 %v491, 0.0
    %v516 = vmax.f32 %v494, 0.0
    %v517 = vmax.f32 %v499, 0.0
    %v518 = vmax.f32 %v502, 0.0
    %v519 = vmax.f32 %v507, 0.0
    %v520 = vmax.f32 %v510, 0.0
    %s521 = scalar_lea.vmem [#allocation5], 192
    %v522 = vld [vmem:[%s521] sm:$0xf]
    %v523 = vld [vmem:[%s521 + $0x4] sm:$0xf]
    %v524 = vld [vmem:[%s521 + $0x8] sm:$0xf]
    %v525 = vld [vmem:[%s521 + $0xc] sm:$0xf]
    %v526 = vld [vmem:[%s521 + $0x10] sm:$0xf]
    %v527 = vld [vmem:[%s521 + $0x14] sm:$0xf]
    %v528 = vld [vmem:[%s521 + $0x18] sm:$0xf]
    %v529 = vld [vmem:[%s521 + $0x1c] sm:$0xf]
    %v530 = vld [vmem:[%s521 + $0x20] sm:$0xf]
    %v531 = vld [vmem:[%s521 + $0x24] sm:$0xf]
    %v532 = vld [vmem:[%s521 + $0x28] sm:$0xf]
    %v533 = vld [vmem:[%s521 + $0x2c] sm:$0xf]
    %v534 = vld [vmem:[%s521 + $0x30] sm:$0xf]
    %v535 = vld [vmem:[%s521 + $0x34] sm:$0xf]
    %v536 = vld [vmem:[%s521 + $0x38] sm:$0xf]
    %v537 = vld [vmem:[%s521 + $0x3c] sm:$0xf]
    %v538 = vpack.c.bf16 %v514, %v513
    %v539 = vpack.c.bf16 %v516, %v515
    %v540 = vpack.c.bf16 %v518, %v517
    %v541 = vpack.c.bf16 %v520, %v519
    %v542 = vlaneseq
    %v543 = vshrl.u32 %v542, 7
    %v544 = vsub.s32 3, %v543
    %v545 = vrot.slane %v55, %v544
    %v562 = vunpack.c.l.b16 %v522
    %v563 = vunpack.c.l.b16 %v523
    %v564 = vunpack.c.l.b16 %v524
    %v565 = vunpack.c.l.b16 %v525
    %v566 = vunpack.c.l.b16 %v526
    %v567 = vunpack.c.l.b16 %v527
    %v568 = vunpack.c.l.b16 %v528
    %v569 = vunpack.c.l.b16 %v529
    %v570 = vunpack.c.l.b16 %v530
    %v571 = vunpack.c.l.b16 %v531
    %v572 = vunpack.c.l.b16 %v532
    %v573 = vunpack.c.l.b16 %v533
    %v574 = vunpack.c.l.b16 %v534
    %v575 = vunpack.c.l.b16 %v535
    %v576 = vunpack.c.l.b16 %v536
    %v577 = vunpack.c.l.b16 %v537
    %v578 = vpack.c.b16 %v563, %v562
    %v579 = vpack.c.b16 %v565, %v564
    %v580 = vpack.c.b16 %v567, %v566
    %v581 = vpack.c.b16 %v569, %v568
    %v582 = vpack.c.b16 %v571, %v570
    %v583 = vpack.c.b16 %v573, %v572
    %v584 = vpack.c.b16 %v575, %v574
    %v585 = vpack.c.b16 %v577, %v576
    %594 = vmatprep.subr.bf16.mxu0 0
    %595 = vmatpush1.bf16.msra.mxu0 %v585
    %596 = vmatprep.subr.bf16.mxu0 0
    %597 = vmatpush1.bf16.msra.mxu0 %v584
    %598 = vmatprep.subr.bf16.mxu0 0
    %599 = vmatpush1.bf16.msra.mxu0 %v583
    %600 = vmatprep.subr.bf16.mxu0 0
    %601 = vmatpush1.bf16.msra.mxu0 %v582
    %602 = vmatprep.subr.bf16.mxu0 0
    %603 = vmatpush1.bf16.msra.mxu0 %v581
    %604 = vmatprep.subr.bf16.mxu0 0
    %605 = vmatpush1.bf16.msra.mxu0 %v580
    %606 = vmatprep.subr.bf16.mxu0 0
    %607 = vmatpush1.bf16.msra.mxu0 %v579
    %608 = vmatprep.subr.bf16.mxu0 0
    %609 = vmatpush1.bf16.msra.mxu0 %v578
    %610 = vmatprep.subr.bf16.mxu0 0
    %611 = vmatpush2.bf16.msra.mxu0 0
    %612 = vmatprep.subr.bf16.mxu0 0
    %613 = vmatpush2.bf16.msra.mxu0 0
    %614 = vmatprep.subr.bf16.mxu0 0
    %615 = vmatpush2.bf16.msra.mxu0 0
    %616 = vmatprep.subr.bf16.mxu0 0
    %617 = vmatpush2.bf16.msra.mxu0 0
    %618 = vmatprep.subr.bf16.mxu0 0
    %619 = vmatpush2.bf16.msra.mxu0 0
    %620 = vmatprep.subr.bf16.mxu0 0
    %621 = vmatpush2.bf16.msra.mxu0 0
    %622 = vmatprep.subr.bf16.mxu0 0
    %623 = vmatpush2.bf16.msra.mxu0 0
    %624 = vmatprep.subr.bf16.mxu0 0
    %625 = vmatpush2.bf16.msra.mxu0 0
    %626 = vmatprep.mubr.bf16.mxu0 0
    %627 = vmatmul.mubr.bf16.gmra.mxu0 %v538
    %v628 = vpop.f32.mrf.mxu0
    %v629 = vadd.f32 %v545, %v628
    %v630 = vpop.f32.mrf.mxu0
    %v631 = vpop.f32.mrf.mxu0
    %v632 = vadd.f32 %v545, %v631
    %v633 = vpop.f32.mrf.mxu0
    %634 = vmatprep.mubr.bf16.mxu0 0
    %635 = vmatmul.mubr.bf16.gmra.mxu0 %v539
    %v636 = vpop.f32.mrf.mxu0
    %v637 = vadd.f32 %v545, %v636
    %v638 = vpop.f32.mrf.mxu0
    %v639 = vpop.f32.mrf.mxu0
    %v640 = vadd.f32 %v545, %v639
    %v641 = vpop.f32.mrf.mxu0
    %642 = vmatprep.mubr.bf16.mxu0 0
    %643 = vmatmul.mubr.bf16.gmra.mxu0 %v540
    %v644 = vpop.f32.mrf.mxu0
    %v645 = vadd.f32 %v545, %v644
    %v646 = vpop.f32.mrf.mxu0
    %v647 = vpop.f32.mrf.mxu0
    %v648 = vadd.f32 %v545, %v647
    %v649 = vpop.f32.mrf.mxu0
    %650 = vmatprep.mubr.bf16.mxu0 0
    %651 = vmatmul.mubr.bf16.gmra.mxu0 %v541
    %v652 = vpop.f32.mrf.mxu0
    %v653 = vadd.f32 %v545, %v652
    %v654 = vpop.f32.mrf.mxu0
    %v655 = vpop.f32.mrf.mxu0
    %v656 = vadd.f32 %v545, %v655
    %v657 = vpop.f32.mrf.mxu0
    %658 = vdwg.mxu0
    %v659 = vmax.f32 %v629, 0.0
    %v660 = vmax.f32 %v632, 0.0
    %v661 = vmax.f32 %v637, 0.0
    %v662 = vmax.f32 %v640, 0.0
    %v663 = vmax.f32 %v645, 0.0
    %v664 = vmax.f32 %v648, 0.0
    %v665 = vmax.f32 %v653, 0.0
    %v666 = vmax.f32 %v656, 0.0
    %s667 = scalar_lea.vmem [#allocation5], 256
    %v668 = vld [vmem:[%s667] sm:$0xf]
    %v669 = vld [vmem:[%s667 + $0x4] sm:$0xf]
    %v670 = vld [vmem:[%s667 + $0x8] sm:$0xf]
    %v671 = vld [vmem:[%s667 + $0xc] sm:$0xf]
    %v672 = vld [vmem:[%s667 + $0x10] sm:$0xf]
    %v673 = vld [vmem:[%s667 + $0x14] sm:$0xf]
    %v674 = vld [vmem:[%s667 + $0x18] sm:$0xf]
    %v675 = vld [vmem:[%s667 + $0x1c] sm:$0xf]
    %v676 = vld [vmem:[%s667 + $0x20] sm:$0xf]
    %v677 = vld [vmem:[%s667 + $0x24] sm:$0xf]
    %v678 = vld [vmem:[%s667 + $0x28] sm:$0xf]
    %v679 = vld [vmem:[%s667 + $0x2c] sm:$0xf]
    %v680 = vld [vmem:[%s667 + $0x30] sm:$0xf]
    %v681 = vld [vmem:[%s667 + $0x34] sm:$0xf]
    %v682 = vld [vmem:[%s667 + $0x38] sm:$0xf]
    %v683 = vld [vmem:[%s667 + $0x3c] sm:$0xf]
    %v684 = vpack.c.bf16 %v660, %v659
    %v685 = vpack.c.bf16 %v662, %v661
    %v686 = vpack.c.bf16 %v664, %v663
    %v687 = vpack.c.bf16 %v666, %v665
    %v688 = vlaneseq
    %v689 = vshrl.u32 %v688, 7
    %v690 = vsub.s32 4, %v689
    %v691 = vrot.slane %v55, %v690
    %v708 = vunpack.c.l.b16 %v668
    %v709 = vunpack.c.l.b16 %v669
    %v710 = vunpack.c.l.b16 %v670
    %v711 = vunpack.c.l.b16 %v671
    %v712 = vunpack.c.l.b16 %v672
    %v713 = vunpack.c.l.b16 %v673
    %v714 = vunpack.c.l.b16 %v674
    %v715 = vunpack.c.l.b16 %v675
    %v716 = vunpack.c.l.b16 %v676
    %v717 = vunpack.c.l.b16 %v677
    %v718 = vunpack.c.l.b16 %v678
    %v719 = vunpack.c.l.b16 %v679
    %v720 = vunpack.c.l.b16 %v680
    %v721 = vunpack.c.l.b16 %v681
    %v722 = vunpack.c.l.b16 %v682
    %v723 = vunpack.c.l.b16 %v683
    %v724 = vpack.c.b16 %v709, %v708
    %v725 = vpack.c.b16 %v711, %v710
    %v726 = vpack.c.b16 %v713, %v712
    %v727 = vpack.c.b16 %v715, %v714
    %v728 = vpack.c.b16 %v717, %v716
    %v729 = vpack.c.b16 %v719, %v718
    %v730 = vpack.c.b16 %v721, %v720
    %v731 = vpack.c.b16 %v723, %v722
    %740 = vmatprep.subr.bf16.mxu0 0
    %741 = vmatpush1.bf16.msra.mxu0 %v731
    %742 = vmatprep.subr.bf16.mxu0 0
    %743 = vmatpush1.bf16.msra.mxu0 %v730
    %744 = vmatprep.subr.bf16.mxu0 0
    %745 = vmatpush1.bf16.msra.mxu0 %v729
    %746 = vmatprep.subr.bf16.mxu0 0
    %747 = vmatpush1.bf16.msra.mxu0 %v728
    %748 = vmatprep.subr.bf16.mxu0 0
    %749 = vmatpush1.bf16.msra.mxu0 %v727
    %750 = vmatprep.subr.bf16.mxu0 0
    %751 = vmatpush1.bf16.msra.mxu0 %v726
    %752 = vmatprep.subr.bf16.mxu0 0
    %753 = vmatpush1.bf16.msra.mxu0 %v725
    %754 = vmatprep.subr.bf16.mxu0 0
    %755 = vmatpush1.bf16.msra.mxu0 %v724
    %756 = vmatprep.subr.bf16.mxu0 0
    %757 = vmatpush2.bf16.msra.mxu0 0
    %758 = vmatprep.subr.bf16.mxu0 0
    %759 = vmatpush2.bf16.msra.mxu0 0
    %760 = vmatprep.subr.bf16.mxu0 0
    %761 = vmatpush2.bf16.msra.mxu0 0
    %762 = vmatprep.subr.bf16.mxu0 0
    %763 = vmatpush2.bf16.msra.mxu0 0
    %764 = vmatprep.subr.bf16.mxu0 0
    %765 = vmatpush2.bf16.msra.mxu0 0
    %766 = vmatprep.subr.bf16.mxu0 0
    %767 = vmatpush2.bf16.msra.mxu0 0
    %768 = vmatprep.subr.bf16.mxu0 0
    %769 = vmatpush2.bf16.msra.mxu0 0
    %770 = vmatprep.subr.bf16.mxu0 0
    %771 = vmatpush2.bf16.msra.mxu0 0
    %772 = vmatprep.mubr.bf16.mxu0 0
    %773 = vmatmul.mubr.bf16.gmra.mxu0 %v684
    %v774 = vpop.f32.mrf.mxu0
    %v775 = vadd.f32 %v691, %v774
    %v776 = vpop.f32.mrf.mxu0
    %v777 = vpop.f32.mrf.mxu0
    %v778 = vadd.f32 %v691, %v777
    %v779 = vpop.f32.mrf.mxu0
    %780 = vmatprep.mubr.bf16.mxu0 0
    %781 = vmatmul.mubr.bf16.gmra.mxu0 %v685
    %v782 = vpop.f32.mrf.mxu0
    %v783 = vadd.f32 %v691, %v782
    %v784 = vpop.f32.mrf.mxu0
    %v785 = vpop.f32.mrf.mxu0
    %v786 = vadd.f32 %v691, %v785
    %v787 = vpop.f32.mrf.mxu0
    %788 = vmatprep.mubr.bf16.mxu0 0
    %789 = vmatmul.mubr.bf16.gmra.mxu0 %v686
    %v790 = vpop.f32.mrf.mxu0
    %v791 = vadd.f32 %v691, %v790
    %v792 = vpop.f32.mrf.mxu0
    %v793 = vpop.f32.mrf.mxu0
    %v794 = vadd.f32 %v691, %v793
    %v795 = vpop.f32.mrf.mxu0
    %796 = vmatprep.mubr.bf16.mxu0 0
    %797 = vmatmul.mubr.bf16.gmra.mxu0 %v687
    %v798 = vpop.f32.mrf.mxu0
    %v799 = vadd.f32 %v691, %v798
    %v800 = vpop.f32.mrf.mxu0
    %v801 = vpop.f32.mrf.mxu0
    %v802 = vadd.f32 %v691, %v801
    %v803 = vpop.f32.mrf.mxu0
    %804 = vdwg.mxu0
    %v805 = vmax.f32 %v775, 0.0
    %v806 = vmax.f32 %v778, 0.0
    %v807 = vmax.f32 %v783, 0.0
    %v808 = vmax.f32 %v786, 0.0
    %v809 = vmax.f32 %v791, 0.0
    %v810 = vmax.f32 %v794, 0.0
    %v811 = vmax.f32 %v799, 0.0
    %v812 = vmax.f32 %v802, 0.0
    %s813 = scalar_lea.vmem [#allocation5], 320
    %v814 = vld [vmem:[%s813] sm:$0xf]
    %v815 = vld [vmem:[%s813 + $0x4] sm:$0xf]
    %v816 = vld [vmem:[%s813 + $0x8] sm:$0xf]
    %v817 = vld [vmem:[%s813 + $0xc] sm:$0xf]
    %v818 = vld [vmem:[%s813 + $0x10] sm:$0xf]
    %v819 = vld [vmem:[%s813 + $0x14] sm:$0xf]
    %v820 = vld [vmem:[%s813 + $0x18] sm:$0xf]
    %v821 = vld [vmem:[%s813 + $0x1c] sm:$0xf]
    %v822 = vld [vmem:[%s813 + $0x20] sm:$0xf]
    %v823 = vld [vmem:[%s813 + $0x24] sm:$0xf]
    %v824 = vld [vmem:[%s813 + $0x28] sm:$0xf]
    %v825 = vld [vmem:[%s813 + $0x2c] sm:$0xf]
    %v826 = vld [vmem:[%s813 + $0x30] sm:$0xf]
    %v827 = vld [vmem:[%s813 + $0x34] sm:$0xf]
    %v828 = vld [vmem:[%s813 + $0x38] sm:$0xf]
    %v829 = vld [vmem:[%s813 + $0x3c] sm:$0xf]
    %v830 = vpack.c.bf16 %v806, %v805
    %v831 = vpack.c.bf16 %v808, %v807
    %v832 = vpack.c.bf16 %v810, %v809
    %v833 = vpack.c.bf16 %v812, %v811
    %v834 = vlaneseq
    %v835 = vshrl.u32 %v834, 7
    %v836 = vsub.s32 5, %v835
    %v837 = vrot.slane %v55, %v836
    %v854 = vunpack.c.l.b16 %v814
    %v855 = vunpack.c.l.b16 %v815
    %v856 = vunpack.c.l.b16 %v816
    %v857 = vunpack.c.l.b16 %v817
    %v858 = vunpack.c.l.b16 %v818
    %v859 = vunpack.c.l.b16 %v819
    %v860 = vunpack.c.l.b16 %v820
    %v861 = vunpack.c.l.b16 %v821
    %v862 = vunpack.c.l.b16 %v822
    %v863 = vunpack.c.l.b16 %v823
    %v864 = vunpack.c.l.b16 %v824
    %v865 = vunpack.c.l.b16 %v825
    %v866 = vunpack.c.l.b16 %v826
    %v867 = vunpack.c.l.b16 %v827
    %v868 = vunpack.c.l.b16 %v828
    %v869 = vunpack.c.l.b16 %v829
    %v870 = vpack.c.b16 %v855, %v854
    %v871 = vpack.c.b16 %v857, %v856
    %v872 = vpack.c.b16 %v859, %v858
    %v873 = vpack.c.b16 %v861, %v860
    %v874 = vpack.c.b16 %v863, %v862
    %v875 = vpack.c.b16 %v865, %v864
    %v876 = vpack.c.b16 %v867, %v866
    %v877 = vpack.c.b16 %v869, %v868
    %886 = vmatprep.subr.bf16.mxu0 0
    %887 = vmatpush1.bf16.msra.mxu0 %v877
    %888 = vmatprep.subr.bf16.mxu0 0
    %889 = vmatpush1.bf16.msra.mxu0 %v876
    %890 = vmatprep.subr.bf16.mxu0 0
    %891 = vmatpush1.bf16.msra.mxu0 %v875
    %892 = vmatprep.subr.bf16.mxu0 0
    %893 = vmatpush1.bf16.msra.mxu0 %v874
    %894 = vmatprep.subr.bf16.mxu0 0
    %895 = vmatpush1.bf16.msra.mxu0 %v873
    %896 = vmatprep.subr.bf16.mxu0 0
    %897 = vmatpush1.bf16.msra.mxu0 %v872
    %898 = vmatprep.subr.bf16.mxu0 0
    %899 = vmatpush1.bf16.msra.mxu0 %v871
    %900 = vmatprep.subr.bf16.mxu0 0
    %901 = vmatpush1.bf16.msra.mxu0 %v870
    %902 = vmatprep.subr.bf16.mxu0 0
    %903 = vmatpush2.bf16.msra.mxu0 0
    %904 = vmatprep.subr.bf16.mxu0 0
    %905 = vmatpush2.bf16.msra.mxu0 0
    %906 = vmatprep.subr.bf16.mxu0 0
    %907 = vmatpush2.bf16.msra.mxu0 0
    %908 = vmatprep.subr.bf16.mxu0 0
    %909 = vmatpush2.bf16.msra.mxu0 0
    %910 = vmatprep.subr.bf16.mxu0 0
    %911 = vmatpush2.bf16.msra.mxu0 0
    %912 = vmatprep.subr.bf16.mxu0 0
    %913 = vmatpush2.bf16.msra.mxu0 0
    %914 = vmatprep.subr.bf16.mxu0 0
    %915 = vmatpush2.bf16.msra.mxu0 0
    %916 = vmatprep.subr.bf16.mxu0 0
    %917 = vmatpush2.bf16.msra.mxu0 0
    %918 = vmatprep.mubr.bf16.mxu0 0
    %919 = vmatmul.mubr.bf16.gmra.mxu0 %v830
    %v920 = vpop.f32.mrf.mxu0
    %v921 = vadd.f32 %v837, %v920
    %v922 = vpop.f32.mrf.mxu0
    %v923 = vpop.f32.mrf.mxu0
    %v924 = vadd.f32 %v837, %v923
    %v925 = vpop.f32.mrf.mxu0
    %926 = vmatprep.mubr.bf16.mxu0 0
    %927 = vmatmul.mubr.bf16.gmra.mxu0 %v831
    %v928 = vpop.f32.mrf.mxu0
    %v929 = vadd.f32 %v837, %v928
    %v930 = vpop.f32.mrf.mxu0
    %v931 = vpop.f32.mrf.mxu0
    %v932 = vadd.f32 %v837, %v931
    %v933 = vpop.f32.mrf.mxu0
    %934 = vmatprep.mubr.bf16.mxu0 0
    %935 = vmatmul.mubr.bf16.gmra.mxu0 %v832
    %v936 = vpop.f32.mrf.mxu0
    %v937 = vadd.f32 %v837, %v936
    %v938 = vpop.f32.mrf.mxu0
    %v939 = vpop.f32.mrf.mxu0
    %v940 = vadd.f32 %v837, %v939
    %v941 = vpop.f32.mrf.mxu0
    %942 = vmatprep.mubr.bf16.mxu0 0
    %943 = vmatmul.mubr.bf16.gmra.mxu0 %v833
    %v944 = vpop.f32.mrf.mxu0
    %v945 = vadd.f32 %v837, %v944
    %v946 = vpop.f32.mrf.mxu0
    %v947 = vpop.f32.mrf.mxu0
    %v948 = vadd.f32 %v837, %v947
    %v949 = vpop.f32.mrf.mxu0
    %950 = vdwg.mxu0
    %951 = vst [vmem:[#allocation8] sm:$0xff] %v921
    %952 = vst [vmem:[#allocation8 + $0x8] sm:$0xff] %v924
    %953 = vst [vmem:[#allocation8 + $0x10] sm:$0xff] %v929
    %954 = vst [vmem:[#allocation8 + $0x18] sm:$0xff] %v932
    %955 = vst [vmem:[#allocation8 + $0x20] sm:$0xff] %v937
    %956 = vst [vmem:[#allocation8 + $0x28] sm:$0xff] %v940
    %957 = vst [vmem:[#allocation8 + $0x30] sm:$0xff] %v945
    %958 = vst [vmem:[#allocation8 + $0x38] sm:$0xff] %v948
    // Predicated region
    $region26: #{tpu_custom_call.1} parent=1 // pred_check
      _
    $region27: #{tpu_custom_call.1} parent=1 // pred_check_branch
      %960 = sbr.rel (0) target = $region29
    $region28: #{tpu_custom_call.1} parent=1 // pred_region
      %s962 = ssub.s32 1024, 1024
      %963 = vsyncadd [#allocation4], %s962
      %s964 = sshll.u32 [#allocation8], 4
      %s965 = int_to_ptr.vmem [resolvable:$true] %s964
      %970 = dma.vmem_to_hbm [thread:$0]  %s965, 1024, %s3, [#allocation4], 128, 128, 8
    $region29: #{tpu_custom_call.1} parent=1 // pred_fallthru
      _
    // Predicated region
    $region30: #{tpu_custom_call.1} parent=1 // pred_check
      _
    $region31: #{tpu_custom_call.1} parent=1 // pred_check_branch
      %972 = sbr.rel (0) target = $region33
    $region32: #{tpu_custom_call.1} parent=1 // pred_region
      %973 = dma.done [#allocation4], 1024
    $region33: #{tpu_custom_call.1} parent=1 // pred_fallthru
      _
    %974 = vsyncpa [#allocation3], 1
    %975 = vsyncpa [#allocation6], 1
    %976 = vsyncpa [#allocation4], 1

// kernel: tpu_custom_call.1
$region0: #{tpu_custom_call.1}
  #allocation0 [shape = 'u32[]', space=smem, size = 0x4, offset = 0x4, fixed_abs, tag = 'smem constant byte address 0x4 - core index']
  #allocation1 [shape = 'u32[144,128]{1,0:T(1,128)}', space=vmem, size = 0x12000, scoped, tag = 'internal scratch']
  %s0 = inlined_call_operand.hbm [shape: bf16[64,128], index: 0, kind: input, shape index: {}]
  %s1 = inlined_call_operand.hbm [shape: bf16[6,128,128], index: 1, kind: input, shape index: {}]
  %s2 = inlined_call_operand.hbm [shape: f32[6,128], index: 2, kind: input, shape index: {}]
  %s3 = inlined_call_operand.hbm [shape: f32[64,128], index: 3, kind: output, shape index: {}]
  %s4 = sld [smem:[#allocation0]]
  $region34: #{tpu_custom_call.1} parent=0
    _
  %s6 = ssub.s32 1, %s4
  %s7 = scalar_select 0, %s6, %s4
  $region1: #{tpu_custom_call.1} parent=0
    #allocation2 [shape = 'u8[16384]{0}', space=vmem, size = 0x4000, scoped, tag = 'input window, operand 0, single buffered']
    #allocation3 [shape = 's32[1]{0}', space=sflag, size = 0x4, scoped, tag = 'scoped memory for tpu_custom_call.1']
    #allocation4 [shape = 's32[1]{0}', space=sflag, size = 0x4, scoped, tag = 'scoped memory for tpu_custom_call.1']
    #allocation5 [shape = 'u8[196608]{0}', space=vmem, size = 0x30000, scoped, tag = 'input window, operand 1, single buffered']
    #allocation6 [shape = 's32[1]{0}', space=sflag, size = 0x4, scoped, tag = 'scoped memory for tpu_custom_call.1']
    #allocation7 [shape = 'u8[4096]{0}', space=vmem, size = 0x1000, scoped, tag = 'input window, operand 2, single buffered']
    #allocation8 [shape = 'u8[32768]{0}', space=vmem, size = 0x8000, scoped, tag = 'output window, operand 0, single buffered']
    %8 = vsyncpa [#allocation3], 0
    %9 = vsyncpa [#allocation6], 0
    %10 = vsyncpa [#allocation4], 0
    // Predicated region
    $region2: #{tpu_custom_call.1} parent=1 // pred_check
      _
    $region3: #{tpu_custom_call.1} parent=1 // pred_check_branch
      %12 = sbr.rel (0) target = $region5
    $region4: #{tpu_custom_call.1} parent=1 // pred_region
      %s14 = ssub.s32 512, 512
      %15 = vsyncadd [#allocation3], %s14
      %s16 = sshll.u32 [#allocation2], 4
      %s17 = int_to_ptr.vmem [resolvable:$true] %s16
      %22 = dma.hbm_to_vmem [thread:$0]  %s0, 512, %s17, [#allocation3], 64, 64, 4
    $region5: #{tpu_custom_call.1} parent=1 // pred_fallthru
      _
    // Predicated region
    $region6: #{tpu_custom_call.1} parent=1 // pred_check
      _
    $region7: #{tpu_custom_call.1} parent=1 // pred_check_branch
      %24 = sbr.rel (0) target = $region9
    $region8: #{tpu_custom_call.1} parent=1 // pred_region
      %s26 = ssub.s32 6144, 6144
      %27 = vsyncadd [#allocation6], %s26
      %s28 = sshll.u32 [#allocation5], 4
      %s29 = int_to_ptr.vmem [resolvable:$true] %s28
      %34 = dma.hbm_to_vmem [thread:$0]  %s1, 6144, %s29, [#allocation6], 64, 64, 4
    $region9: #{tpu_custom_call.1} parent=1 // pred_fallthru
      _
    // Predicated region
    $region10: #{tpu_custom_call.1} parent=1 // pred_check
      _
    $region11: #{tpu_custom_call.1} parent=1 // pred_check_branch
      %36 = sbr.rel (0) target = $region13
    $region12: #{tpu_custom_call.1} parent=1 // pred_region
      %s38 = ssub.s32 128, 128
      %39 = vsyncadd [#allocation6], %s38
      %s41 = sshll.u32 [#allocation7], 4
      %s42 = int_to_ptr.vmem [resolvable:$true] %s41
      %44 = dma.hbm_to_vmem [thread:$0]  %s2, 128, %s42, [#allocation6]
    $region13: #{tpu_custom_call.1} parent=1 // pred_fallthru
      _
    // Predicated region
    $region14: #{tpu_custom_call.1} parent=1 // pred_check
      _
    $region15: #{tpu_custom_call.1} parent=1 // pred_check_branch
      %46 = sbr.rel (0) target = $region17
    $region16: #{tpu_custom_call.1} parent=1 // pred_region
      %47 = dma.done [#allocation3], 512
    $region17: #{tpu_custom_call.1} parent=1 // pred_fallthru
      _
    // Predicated region
    $region18: #{tpu_custom_call.1} parent=1 // pred_check
      _
    $region19: #{tpu_custom_call.1} parent=1 // pred_check_branch
      %49 = sbr.rel (0) target = $region21
    $region20: #{tpu_custom_call.1} parent=1 // pred_region
      %50 = dma.done [#allocation6], 6144
    $region21: #{tpu_custom_call.1} parent=1 // pred_fallthru
      _
    // Predicated region
    $region22: #{tpu_custom_call.1} parent=1 // pred_check
      _
    $region23: #{tpu_custom_call.1} parent=1 // pred_check_branch
      %52 = sbr.rel (0) target = $region25
    $region24: #{tpu_custom_call.1} parent=1 // pred_region
      %53 = dma.done [#allocation6], 128
    $region25: #{tpu_custom_call.1} parent=1 // pred_fallthru
      _
    %v55 = vld [vmem:[#allocation7] sm:$0x3f]
    %v56 = vld [vmem:[#allocation2] sm:$0xf]
    %v57 = vld [vmem:[#allocation2 + $0x4] sm:$0xf]
    %v58 = vld [vmem:[#allocation2 + $0x8] sm:$0xf]
    %v59 = vld [vmem:[#allocation2 + $0xc] sm:$0xf]
    %v60 = vld [vmem:[#allocation2 + $0x10] sm:$0xf]
    %v61 = vld [vmem:[#allocation2 + $0x14] sm:$0xf]
    %v62 = vld [vmem:[#allocation2 + $0x18] sm:$0xf]
    %v63 = vld [vmem:[#allocation2 + $0x1c] sm:$0xf]
    %v64 = vld [vmem:[#allocation5] sm:$0xf]
    %v65 = vld [vmem:[#allocation5 + $0x4] sm:$0xf]
    %v66 = vld [vmem:[#allocation5 + $0x8] sm:$0xf]
    %v67 = vld [vmem:[#allocation5 + $0xc] sm:$0xf]
    %v68 = vld [vmem:[#allocation5 + $0x10] sm:$0xf]
    %v69 = vld [vmem:[#allocation5 + $0x14] sm:$0xf]
    %v70 = vld [vmem:[#allocation5 + $0x18] sm:$0xf]
    %v71 = vld [vmem:[#allocation5 + $0x1c] sm:$0xf]
    %v72 = vld [vmem:[#allocation5 + $0x20] sm:$0xf]
    %v73 = vld [vmem:[#allocation5 + $0x24] sm:$0xf]
    %v74 = vld [vmem:[#allocation5 + $0x28] sm:$0xf]
    %v75 = vld [vmem:[#allocation5 + $0x2c] sm:$0xf]
    %v76 = vld [vmem:[#allocation5 + $0x30] sm:$0xf]
    %v77 = vld [vmem:[#allocation5 + $0x34] sm:$0xf]
    %v78 = vld [vmem:[#allocation5 + $0x38] sm:$0xf]
    %v79 = vld [vmem:[#allocation5 + $0x3c] sm:$0xf]
    %v80 = vlaneseq
    %v81 = vshrl.u32 %v80, 7
    %v82 = vsub.s32 0, %v81
    %v83 = vrot.slane %v55, %v82
    %v92 = vunpack.c.l.b16 %v56
    %v93 = vunpack.c.l.b16 %v57
    %v94 = vunpack.c.l.b16 %v58
    %v95 = vunpack.c.l.b16 %v59
    %v96 = vunpack.c.l.b16 %v60
    %v97 = vunpack.c.l.b16 %v61
    %v98 = vunpack.c.l.b16 %v62
    %v99 = vunpack.c.l.b16 %v63
    %v100 = vpack.c.b16 %v93, %v92
    %v101 = vpack.c.b16 %v95, %v94
    %v102 = vpack.c.b16 %v97, %v96
    %v103 = vpack.c.b16 %v99, %v98
    %v124 = vunpack.c.l.b16 %v64
    %v125 = vunpack.c.l.b16 %v65
    %v126 = vunpack.c.l.b16 %v66
    %v127 = vunpack.c.l.b16 %v67
    %v128 = vunpack.c.l.b16 %v68
    %v129 = vunpack.c.l.b16 %v69
    %v130 = vunpack.c.l.b16 %v70
    %v131 = vunpack.c.l.b16 %v71
    %v132 = vunpack.c.l.b16 %v72
    %v133 = vunpack.c.l.b16 %v73
    %v134 = vunpack.c.l.b16 %v74
    %v135 = vunpack.c.l.b16 %v75
    %v136 = vunpack.c.l.b16 %v76
    %v137 = vunpack.c.l.b16 %v77
    %v138 = vunpack.c.l.b16 %v78
    %v139 = vunpack.c.l.b16 %v79
    %v140 = vpack.c.b16 %v125, %v124
    %v141 = vpack.c.b16 %v127, %v126
    %v142 = vpack.c.b16 %v129, %v128
    %v143 = vpack.c.b16 %v131, %v130
    %v144 = vpack.c.b16 %v133, %v132
    %v145 = vpack.c.b16 %v135, %v134
    %v146 = vpack.c.b16 %v137, %v136
    %v147 = vpack.c.b16 %v139, %v138
    %156 = vmatprep.subr.bf16.mxu0 0
    %157 = vmatpush1.bf16.msra.mxu0 %v147
    %158 = vmatprep.subr.bf16.mxu0 0
    %159 = vmatpush1.bf16.msra.mxu0 %v146
    %160 = vmatprep.subr.bf16.mxu0 0
    %161 = vmatpush1.bf16.msra.mxu0 %v145
    %162 = vmatprep.subr.bf16.mxu0 0
    %163 = vmatpush1.bf16.msra.mxu0 %v144
    %164 = vmatprep.subr.bf16.mxu0 0
    %165 = vmatpush1.bf16.msra.mxu0 %v143
    %166 = vmatprep.subr.bf16.mxu0 0
    %167 = vmatpush1.bf16.msra.mxu0 %v142
    %168 = vmatprep.subr.bf16.mxu0 0
    %169 = vmatpush1.bf16.msra.mxu0 %v141
    %170 = vmatprep.subr.bf16.mxu0 0
    %171 = vmatpush1.bf16.msra.mxu0 %v140
    %172 = vmatprep.subr.bf16.mxu0 0
    %173 = vmatpush2.bf16.msra.mxu0 0
    %174 = vmatprep.subr.bf16.mxu0 0
    %175 = vmatpush2.bf16.msra.mxu0 0
    %176 = vmatprep.subr.bf16.mxu0 0
    %177 = vmatpush2.bf16.msra.mxu0 0
    %178 = vmatprep.subr.bf16.mxu0 0
    %179 = vmatpush2.bf16.msra.mxu0 0
    %180 = vmatprep.subr.bf16.mxu0 0
    %181 = vmatpush2.bf16.msra.mxu0 0
    %182 = vmatprep.subr.bf16.mxu0 0
    %183 = vmatpush2.bf16.msra.mxu0 0
    %184 = vmatprep.subr.bf16.mxu0 0
    %185 = vmatpush2.bf16.msra.mxu0 0
    %186 = vmatprep.subr.bf16.mxu0 0
    %187 = vmatpush2.bf16.msra.mxu0 0
    %188 = vmatprep.mubr.bf16.mxu0 0
    %189 = vmatmul.mubr.bf16.gmra.mxu0 %v100
    %v190 = vpop.f32.mrf.mxu0
    %v191 = vadd.f32 %v83, %v190
    %v192 = vpop.f32.mrf.mxu0
    %v193 = vpop.f32.mrf.mxu0
    %v194 = vadd.f32 %v83, %v193
    %v195 = vpop.f32.mrf.mxu0
    %196 = vmatprep.mubr.bf16.mxu0 0
    %197 = vmatmul.mubr.bf16.gmra.mxu0 %v101
    %v198 = vpop.f32.mrf.mxu0
    %v199 = vadd.f32 %v83, %v198
    %v200 = vpop.f32.mrf.mxu0
    %v201 = vpop.f32.mrf.mxu0
    %v202 = vadd.f32 %v83, %v201
    %v203 = vpop.f32.mrf.mxu0
    %204 = vmatprep.mubr.bf16.mxu0 0
    %205 = vmatmul.mubr.bf16.gmra.mxu0 %v102
    %v206 = vpop.f32.mrf.mxu0
    %v207 = vadd.f32 %v83, %v206
    %v208 = vpop.f32.mrf.mxu0
    %v209 = vpop.f32.mrf.mxu0
    %v210 = vadd.f32 %v83, %v209
    %v211 = vpop.f32.mrf.mxu0
    %212 = vmatprep.mubr.bf16.mxu0 0
    %213 = vmatmul.mubr.bf16.gmra.mxu0 %v103
    %v214 = vpop.f32.mrf.mxu0
    %v215 = vadd.f32 %v83, %v214
    %v216 = vpop.f32.mrf.mxu0
    %v217 = vpop.f32.mrf.mxu0
    %v218 = vadd.f32 %v83, %v217
    %v219 = vpop.f32.mrf.mxu0
    %220 = vdwg.mxu0
    %v221 = vmax.f32 %v191, 0.0
    %v222 = vmax.f32 %v194, 0.0
    %v223 = vmax.f32 %v199, 0.0
    %v224 = vmax.f32 %v202, 0.0
    %v225 = vmax.f32 %v207, 0.0
    %v226 = vmax.f32 %v210, 0.0
    %v227 = vmax.f32 %v215, 0.0
    %v228 = vmax.f32 %v218, 0.0
    %s229 = scalar_lea.vmem [#allocation5], 64
    %v230 = vld [vmem:[%s229] sm:$0xf]
    %v231 = vld [vmem:[%s229 + $0x4] sm:$0xf]
    %v232 = vld [vmem:[%s229 + $0x8] sm:$0xf]
    %v233 = vld [vmem:[%s229 + $0xc] sm:$0xf]
    %v234 = vld [vmem:[%s229 + $0x10] sm:$0xf]
    %v235 = vld [vmem:[%s229 + $0x14] sm:$0xf]
    %v236 = vld [vmem:[%s229 + $0x18] sm:$0xf]
    %v237 = vld [vmem:[%s229 + $0x1c] sm:$0xf]
    %v238 = vld [vmem:[%s229 + $0x20] sm:$0xf]
    %v239 = vld [vmem:[%s229 + $0x24] sm:$0xf]
    %v240 = vld [vmem:[%s229 + $0x28] sm:$0xf]
    %v241 = vld [vmem:[%s229 + $0x2c] sm:$0xf]
    %v242 = vld [vmem:[%s229 + $0x30] sm:$0xf]
    %v243 = vld [vmem:[%s229 + $0x34] sm:$0xf]
    %v244 = vld [vmem:[%s229 + $0x38] sm:$0xf]
    %v245 = vld [vmem:[%s229 + $0x3c] sm:$0xf]
    %v246 = vpack.c.bf16 %v222, %v221
    %v247 = vpack.c.bf16 %v224, %v223
    %v248 = vpack.c.bf16 %v226, %v225
    %v249 = vpack.c.bf16 %v228, %v227
    %v250 = vlaneseq
    %v251 = vshrl.u32 %v250, 7
    %v252 = vsub.s32 1, %v251
    %v253 = vrot.slane %v55, %v252
    %v270 = vunpack.c.l.b16 %v230
    %v271 = vunpack.c.l.b16 %v231
    %v272 = vunpack.c.l.b16 %v232
    %v273 = vunpack.c.l.b16 %v233
    %v274 = vunpack.c.l.b16 %v234
    %v275 = vunpack.c.l.b16 %v235
    %v276 = vunpack.c.l.b16 %v236
    %v277 = vunpack.c.l.b16 %v237
    %v278 = vunpack.c.l.b16 %v238
    %v279 = vunpack.c.l.b16 %v239
    %v280 = vunpack.c.l.b16 %v240
    %v281 = vunpack.c.l.b16 %v241
    %v282 = vunpack.c.l.b16 %v242
    %v283 = vunpack.c.l.b16 %v243
    %v284 = vunpack.c.l.b16 %v244
    %v285 = vunpack.c.l.b16 %v245
    %v286 = vpack.c.b16 %v271, %v270
    %v287 = vpack.c.b16 %v273, %v272
    %v288 = vpack.c.b16 %v275, %v274
    %v289 = vpack.c.b16 %v277, %v276
    %v290 = vpack.c.b16 %v279, %v278
    %v291 = vpack.c.b16 %v281, %v280
    %v292 = vpack.c.b16 %v283, %v282
    %v293 = vpack.c.b16 %v285, %v284
    %302 = vmatprep.subr.bf16.mxu0 0
    %303 = vmatpush1.bf16.msra.mxu0 %v293
    %304 = vmatprep.subr.bf16.mxu0 0
    %305 = vmatpush1.bf16.msra.mxu0 %v292
    %306 = vmatprep.subr.bf16.mxu0 0
    %307 = vmatpush1.bf16.msra.mxu0 %v291
    %308 = vmatprep.subr.bf16.mxu0 0
    %309 = vmatpush1.bf16.msra.mxu0 %v290
    %310 = vmatprep.subr.bf16.mxu0 0
    %311 = vmatpush1.bf16.msra.mxu0 %v289
    %312 = vmatprep.subr.bf16.mxu0 0
    %313 = vmatpush1.bf16.msra.mxu0 %v288
    %314 = vmatprep.subr.bf16.mxu0 0
    %315 = vmatpush1.bf16.msra.mxu0 %v287
    %316 = vmatprep.subr.bf16.mxu0 0
    %317 = vmatpush1.bf16.msra.mxu0 %v286
    %318 = vmatprep.subr.bf16.mxu0 0
    %319 = vmatpush2.bf16.msra.mxu0 0
    %320 = vmatprep.subr.bf16.mxu0 0
    %321 = vmatpush2.bf16.msra.mxu0 0
    %322 = vmatprep.subr.bf16.mxu0 0
    %323 = vmatpush2.bf16.msra.mxu0 0
    %324 = vmatprep.subr.bf16.mxu0 0
    %325 = vmatpush2.bf16.msra.mxu0 0
    %326 = vmatprep.subr.bf16.mxu0 0
    %327 = vmatpush2.bf16.msra.mxu0 0
    %328 = vmatprep.subr.bf16.mxu0 0
    %329 = vmatpush2.bf16.msra.mxu0 0
    %330 = vmatprep.subr.bf16.mxu0 0
    %331 = vmatpush2.bf16.msra.mxu0 0
    %332 = vmatprep.subr.bf16.mxu0 0
    %333 = vmatpush2.bf16.msra.mxu0 0
    %334 = vmatprep.mubr.bf16.mxu0 0
    %335 = vmatmul.mubr.bf16.gmra.mxu0 %v246
    %v336 = vpop.f32.mrf.mxu0
    %v337 = vadd.f32 %v253, %v336
    %v338 = vpop.f32.mrf.mxu0
    %v339 = vpop.f32.mrf.mxu0
    %v340 = vadd.f32 %v253, %v339
    %v341 = vpop.f32.mrf.mxu0
    %342 = vmatprep.mubr.bf16.mxu0 0
    %343 = vmatmul.mubr.bf16.gmra.mxu0 %v247
    %v344 = vpop.f32.mrf.mxu0
    %v345 = vadd.f32 %v253, %v344
    %v346 = vpop.f32.mrf.mxu0
    %v347 = vpop.f32.mrf.mxu0
    %v348 = vadd.f32 %v253, %v347
    %v349 = vpop.f32.mrf.mxu0
    %350 = vmatprep.mubr.bf16.mxu0 0
    %351 = vmatmul.mubr.bf16.gmra.mxu0 %v248
    %v352 = vpop.f32.mrf.mxu0
    %v353 = vadd.f32 %v253, %v352
    %v354 = vpop.f32.mrf.mxu0
    %v355 = vpop.f32.mrf.mxu0
    %v356 = vadd.f32 %v253, %v355
    %v357 = vpop.f32.mrf.mxu0
    %358 = vmatprep.mubr.bf16.mxu0 0
    %359 = vmatmul.mubr.bf16.gmra.mxu0 %v249
    %v360 = vpop.f32.mrf.mxu0
    %v361 = vadd.f32 %v253, %v360
    %v362 = vpop.f32.mrf.mxu0
    %v363 = vpop.f32.mrf.mxu0
    %v364 = vadd.f32 %v253, %v363
    %v365 = vpop.f32.mrf.mxu0
    %366 = vdwg.mxu0
    %v367 = vmax.f32 %v337, 0.0
    %v368 = vmax.f32 %v340, 0.0
    %v369 = vmax.f32 %v345, 0.0
    %v370 = vmax.f32 %v348, 0.0
    %v371 = vmax.f32 %v353, 0.0
    %v372 = vmax.f32 %v356, 0.0
    %v373 = vmax.f32 %v361, 0.0
    %v374 = vmax.f32 %v364, 0.0
    %s375 = scalar_lea.vmem [#allocation5], 128
    %v376 = vld [vmem:[%s375] sm:$0xf]
    %v377 = vld [vmem:[%s375 + $0x4] sm:$0xf]
    %v378 = vld [vmem:[%s375 + $0x8] sm:$0xf]
    %v379 = vld [vmem:[%s375 + $0xc] sm:$0xf]
    %v380 = vld [vmem:[%s375 + $0x10] sm:$0xf]
    %v381 = vld [vmem:[%s375 + $0x14] sm:$0xf]
    %v382 = vld [vmem:[%s375 + $0x18] sm:$0xf]
    %v383 = vld [vmem:[%s375 + $0x1c] sm:$0xf]
    %v384 = vld [vmem:[%s375 + $0x20] sm:$0xf]
    %v385 = vld [vmem:[%s375 + $0x24] sm:$0xf]
    %v386 = vld [vmem:[%s375 + $0x28] sm:$0xf]
    %v387 = vld [vmem:[%s375 + $0x2c] sm:$0xf]
    %v388 = vld [vmem:[%s375 + $0x30] sm:$0xf]
    %v389 = vld [vmem:[%s375 + $0x34] sm:$0xf]
    %v390 = vld [vmem:[%s375 + $0x38] sm:$0xf]
    %v391 = vld [vmem:[%s375 + $0x3c] sm:$0xf]
    %v392 = vpack.c.bf16 %v368, %v367
    %v393 = vpack.c.bf16 %v370, %v369
    %v394 = vpack.c.bf16 %v372, %v371
    %v395 = vpack.c.bf16 %v374, %v373
    %v396 = vlaneseq
    %v397 = vshrl.u32 %v396, 7
    %v398 = vsub.s32 2, %v397
    %v399 = vrot.slane %v55, %v398
    %v416 = vunpack.c.l.b16 %v376
    %v417 = vunpack.c.l.b16 %v377
    %v418 = vunpack.c.l.b16 %v378
    %v419 = vunpack.c.l.b16 %v379
    %v420 = vunpack.c.l.b16 %v380
    %v421 = vunpack.c.l.b16 %v381
    %v422 = vunpack.c.l.b16 %v382
    %v423 = vunpack.c.l.b16 %v383
    %v424 = vunpack.c.l.b16 %v384
    %v425 = vunpack.c.l.b16 %v385
    %v426 = vunpack.c.l.b16 %v386
    %v427 = vunpack.c.l.b16 %v387
    %v428 = vunpack.c.l.b16 %v388
    %v429 = vunpack.c.l.b16 %v389
    %v430 = vunpack.c.l.b16 %v390
    %v431 = vunpack.c.l.b16 %v391
    %v432 = vpack.c.b16 %v417, %v416
    %v433 = vpack.c.b16 %v419, %v418
    %v434 = vpack.c.b16 %v421, %v420
    %v435 = vpack.c.b16 %v423, %v422
    %v436 = vpack.c.b16 %v425, %v424
    %v437 = vpack.c.b16 %v427, %v426
    %v438 = vpack.c.b16 %v429, %v428
    %v439 = vpack.c.b16 %v431, %v430
    %448 = vmatprep.subr.bf16.mxu0 0
    %449 = vmatpush1.bf16.msra.mxu0 %v439
    %450 = vmatprep.subr.bf16.mxu0 0
    %451 = vmatpush1.bf16.msra.mxu0 %v438
    %452 = vmatprep.subr.bf16.mxu0 0
    %453 = vmatpush1.bf16.msra.mxu0 %v437
    %454 = vmatprep.subr.bf16.mxu0 0
    %455 = vmatpush1.bf16.msra.mxu0 %v436
    %456 = vmatprep.subr.bf16.mxu0 0
    %457 = vmatpush1.bf16.msra.mxu0 %v435
    %458 = vmatprep.subr.bf16.mxu0 0
    %459 = vmatpush1.bf16.msra.mxu0 %v434
    %460 = vmatprep.subr.bf16.mxu0 0
    %461 = vmatpush1.bf16.msra.mxu0 %v433
    %462 = vmatprep.subr.bf16.mxu0 0
    %463 = vmatpush1.bf16.msra.mxu0 %v432
    %464 = vmatprep.subr.bf16.mxu0 0
    %465 = vmatpush2.bf16.msra.mxu0 0
    %466 = vmatprep.subr.bf16.mxu0 0
    %467 = vmatpush2.bf16.msra.mxu0 0
    %468 = vmatprep.subr.bf16.mxu0 0
    %469 = vmatpush2.bf16.msra.mxu0 0
    %470 = vmatprep.subr.bf16.mxu0 0
    %471 = vmatpush2.bf16.msra.mxu0 0
    %472 = vmatprep.subr.bf16.mxu0 0
    %473 = vmatpush2.bf16.msra.mxu0 0
    %474 = vmatprep.subr.bf16.mxu0 0
    %475 = vmatpush2.bf16.msra.mxu0 0
    %476 = vmatprep.subr.bf16.mxu0 0
    %477 = vmatpush2.bf16.msra.mxu0 0
    %478 = vmatprep.subr.bf16.mxu0 0
    %479 = vmatpush2.bf16.msra.mxu0 0
    %480 = vmatprep.mubr.bf16.mxu0 0
    %481 = vmatmul.mubr.bf16.gmra.mxu0 %v392
    %v482 = vpop.f32.mrf.mxu0
    %v483 = vadd.f32 %v399, %v482
    %v484 = vpop.f32.mrf.mxu0
    %v485 = vpop.f32.mrf.mxu0
    %v486 = vadd.f32 %v399, %v485
    %v487 = vpop.f32.mrf.mxu0
    %488 = vmatprep.mubr.bf16.mxu0 0
    %489 = vmatmul.mubr.bf16.gmra.mxu0 %v393
    %v490 = vpop.f32.mrf.mxu0
    %v491 = vadd.f32 %v399, %v490
    %v492 = vpop.f32.mrf.mxu0
    %v493 = vpop.f32.mrf.mxu0
    %v494 = vadd.f32 %v399, %v493
    %v495 = vpop.f32.mrf.mxu0
    %496 = vmatprep.mubr.bf16.mxu0 0
    %497 = vmatmul.mubr.bf16.gmra.mxu0 %v394
    %v498 = vpop.f32.mrf.mxu0
    %v499 = vadd.f32 %v399, %v498
    %v500 = vpop.f32.mrf.mxu0
    %v501 = vpop.f32.mrf.mxu0
    %v502 = vadd.f32 %v399, %v501
    %v503 = vpop.f32.mrf.mxu0
    %504 = vmatprep.mubr.bf16.mxu0 0
    %505 = vmatmul.mubr.bf16.gmra.mxu0 %v395
    %v506 = vpop.f32.mrf.mxu0
    %v507 = vadd.f32 %v399, %v506
    %v508 = vpop.f32.mrf.mxu0
    %v509 = vpop.f32.mrf.mxu0
    %v510 = vadd.f32 %v399, %v509
    %v511 = vpop.f32.mrf.mxu0
    %512 = vdwg.mxu0
    %v513 = vmax.f32 %v483, 0.0
    %v514 = vmax.f32 %v486, 0.0
    %v515 = vmax.f32 %v491, 0.0
    %v516 = vmax.f32 %v494, 0.0
    %v517 = vmax.f32 %v499, 0.0
    %v518 = vmax.f32 %v502, 0.0
    %v519 = vmax.f32 %v507, 0.0
    %v520 = vmax.f32 %v510, 0.0
    %s521 = scalar_lea.vmem [#allocation5], 192
    %v522 = vld [vmem:[%s521] sm:$0xf]
    %v523 = vld [vmem:[%s521 + $0x4] sm:$0xf]
    %v524 = vld [vmem:[%s521 + $0x8] sm:$0xf]
    %v525 = vld [vmem:[%s521 + $0xc] sm:$0xf]
    %v526 = vld [vmem:[%s521 + $0x10] sm:$0xf]
    %v527 = vld [vmem:[%s521 + $0x14] sm:$0xf]
    %v528 = vld [vmem:[%s521 + $0x18] sm:$0xf]
    %v529 = vld [vmem:[%s521 + $0x1c] sm:$0xf]
    %v530 = vld [vmem:[%s521 + $0x20] sm:$0xf]
    %v531 = vld [vmem:[%s521 + $0x24] sm:$0xf]
    %v532 = vld [vmem:[%s521 + $0x28] sm:$0xf]
    %v533 = vld [vmem:[%s521 + $0x2c] sm:$0xf]
    %v534 = vld [vmem:[%s521 + $0x30] sm:$0xf]
    %v535 = vld [vmem:[%s521 + $0x34] sm:$0xf]
    %v536 = vld [vmem:[%s521 + $0x38] sm:$0xf]
    %v537 = vld [vmem:[%s521 + $0x3c] sm:$0xf]
    %v538 = vpack.c.bf16 %v514, %v513
    %v539 = vpack.c.bf16 %v516, %v515
    %v540 = vpack.c.bf16 %v518, %v517
    %v541 = vpack.c.bf16 %v520, %v519
    %v542 = vlaneseq
    %v543 = vshrl.u32 %v542, 7
    %v544 = vsub.s32 3, %v543
    %v545 = vrot.slane %v55, %v544
    %v562 = vunpack.c.l.b16 %v522
    %v563 = vunpack.c.l.b16 %v523
    %v564 = vunpack.c.l.b16 %v524
    %v565 = vunpack.c.l.b16 %v525
    %v566 = vunpack.c.l.b16 %v526
    %v567 = vunpack.c.l.b16 %v527
    %v568 = vunpack.c.l.b16 %v528
    %v569 = vunpack.c.l.b16 %v529
    %v570 = vunpack.c.l.b16 %v530
    %v571 = vunpack.c.l.b16 %v531
    %v572 = vunpack.c.l.b16 %v532
    %v573 = vunpack.c.l.b16 %v533
    %v574 = vunpack.c.l.b16 %v534
    %v575 = vunpack.c.l.b16 %v535
    %v576 = vunpack.c.l.b16 %v536
    %v577 = vunpack.c.l.b16 %v537
    %v578 = vpack.c.b16 %v563, %v562
    %v579 = vpack.c.b16 %v565, %v564
    %v580 = vpack.c.b16 %v567, %v566
    %v581 = vpack.c.b16 %v569, %v568
    %v582 = vpack.c.b16 %v571, %v570
    %v583 = vpack.c.b16 %v573, %v572
    %v584 = vpack.c.b16 %v575, %v574
    %v585 = vpack.c.b16 %v577, %v576
    %594 = vmatprep.subr.bf16.mxu0 0
    %595 = vmatpush1.bf16.msra.mxu0 %v585
    %596 = vmatprep.subr.bf16.mxu0 0
    %597 = vmatpush1.bf16.msra.mxu0 %v584
    %598 = vmatprep.subr.bf16.mxu0 0
    %599 = vmatpush1.bf16.msra.mxu0 %v583
    %600 = vmatprep.subr.bf16.mxu0 0
    %601 = vmatpush1.bf16.msra.mxu0 %v582
    %602 = vmatprep.subr.bf16.mxu0 0
    %603 = vmatpush1.bf16.msra.mxu0 %v581
    %604 = vmatprep.subr.bf16.mxu0 0
    %605 = vmatpush1.bf16.msra.mxu0 %v580
    %606 = vmatprep.subr.bf16.mxu0 0
    %607 = vmatpush1.bf16.msra.mxu0 %v579
    %608 = vmatprep.subr.bf16.mxu0 0
    %609 = vmatpush1.bf16.msra.mxu0 %v578
    %610 = vmatprep.subr.bf16.mxu0 0
    %611 = vmatpush2.bf16.msra.mxu0 0
    %612 = vmatprep.subr.bf16.mxu0 0
    %613 = vmatpush2.bf16.msra.mxu0 0
    %614 = vmatprep.subr.bf16.mxu0 0
    %615 = vmatpush2.bf16.msra.mxu0 0
    %616 = vmatprep.subr.bf16.mxu0 0
    %617 = vmatpush2.bf16.msra.mxu0 0
    %618 = vmatprep.subr.bf16.mxu0 0
    %619 = vmatpush2.bf16.msra.mxu0 0
    %620 = vmatprep.subr.bf16.mxu0 0
    %621 = vmatpush2.bf16.msra.mxu0 0
    %622 = vmatprep.subr.bf16.mxu0 0
    %623 = vmatpush2.bf16.msra.mxu0 0
    %624 = vmatprep.subr.bf16.mxu0 0
    %625 = vmatpush2.bf16.msra.mxu0 0
    %626 = vmatprep.mubr.bf16.mxu0 0
    %627 = vmatmul.mubr.bf16.gmra.mxu0 %v538
    %v628 = vpop.f32.mrf.mxu0
    %v629 = vadd.f32 %v545, %v628
    %v630 = vpop.f32.mrf.mxu0
    %v631 = vpop.f32.mrf.mxu0
    %v632 = vadd.f32 %v545, %v631
    %v633 = vpop.f32.mrf.mxu0
    %634 = vmatprep.mubr.bf16.mxu0 0
    %635 = vmatmul.mubr.bf16.gmra.mxu0 %v539
    %v636 = vpop.f32.mrf.mxu0
    %v637 = vadd.f32 %v545, %v636
    %v638 = vpop.f32.mrf.mxu0
    %v639 = vpop.f32.mrf.mxu0
    %v640 = vadd.f32 %v545, %v639
    %v641 = vpop.f32.mrf.mxu0
    %642 = vmatprep.mubr.bf16.mxu0 0
    %643 = vmatmul.mubr.bf16.gmra.mxu0 %v540
    %v644 = vpop.f32.mrf.mxu0
    %v645 = vadd.f32 %v545, %v644
    %v646 = vpop.f32.mrf.mxu0
    %v647 = vpop.f32.mrf.mxu0
    %v648 = vadd.f32 %v545, %v647
    %v649 = vpop.f32.mrf.mxu0
    %650 = vmatprep.mubr.bf16.mxu0 0
    %651 = vmatmul.mubr.bf16.gmra.mxu0 %v541
    %v652 = vpop.f32.mrf.mxu0
    %v653 = vadd.f32 %v545, %v652
    %v654 = vpop.f32.mrf.mxu0
    %v655 = vpop.f32.mrf.mxu0
    %v656 = vadd.f32 %v545, %v655
    %v657 = vpop.f32.mrf.mxu0
    %658 = vdwg.mxu0
    %v659 = vmax.f32 %v629, 0.0
    %v660 = vmax.f32 %v632, 0.0
    %v661 = vmax.f32 %v637, 0.0
    %v662 = vmax.f32 %v640, 0.0
    %v663 = vmax.f32 %v645, 0.0
    %v664 = vmax.f32 %v648, 0.0
    %v665 = vmax.f32 %v653, 0.0
    %v666 = vmax.f32 %v656, 0.0
    %s667 = scalar_lea.vmem [#allocation5], 256
    %v668 = vld [vmem:[%s667] sm:$0xf]
    %v669 = vld [vmem:[%s667 + $0x4] sm:$0xf]
    %v670 = vld [vmem:[%s667 + $0x8] sm:$0xf]
    %v671 = vld [vmem:[%s667 + $0xc] sm:$0xf]
    %v672 = vld [vmem:[%s667 + $0x10] sm:$0xf]
    %v673 = vld [vmem:[%s667 + $0x14] sm:$0xf]
    %v674 = vld [vmem:[%s667 + $0x18] sm:$0xf]
    %v675 = vld [vmem:[%s667 + $0x1c] sm:$0xf]
    %v676 = vld [vmem:[%s667 + $0x20] sm:$0xf]
    %v677 = vld [vmem:[%s667 + $0x24] sm:$0xf]
    %v678 = vld [vmem:[%s667 + $0x28] sm:$0xf]
    %v679 = vld [vmem:[%s667 + $0x2c] sm:$0xf]
    %v680 = vld [vmem:[%s667 + $0x30] sm:$0xf]
    %v681 = vld [vmem:[%s667 + $0x34] sm:$0xf]
    %v682 = vld [vmem:[%s667 + $0x38] sm:$0xf]
    %v683 = vld [vmem:[%s667 + $0x3c] sm:$0xf]
    %v684 = vpack.c.bf16 %v660, %v659
    %v685 = vpack.c.bf16 %v662, %v661
    %v686 = vpack.c.bf16 %v664, %v663
    %v687 = vpack.c.bf16 %v666, %v665
    %v688 = vlaneseq
    %v689 = vshrl.u32 %v688, 7
    %v690 = vsub.s32 4, %v689
    %v691 = vrot.slane %v55, %v690
    %v708 = vunpack.c.l.b16 %v668
    %v709 = vunpack.c.l.b16 %v669
    %v710 = vunpack.c.l.b16 %v670
    %v711 = vunpack.c.l.b16 %v671
    %v712 = vunpack.c.l.b16 %v672
    %v713 = vunpack.c.l.b16 %v673
    %v714 = vunpack.c.l.b16 %v674
    %v715 = vunpack.c.l.b16 %v675
    %v716 = vunpack.c.l.b16 %v676
    %v717 = vunpack.c.l.b16 %v677
    %v718 = vunpack.c.l.b16 %v678
    %v719 = vunpack.c.l.b16 %v679
    %v720 = vunpack.c.l.b16 %v680
    %v721 = vunpack.c.l.b16 %v681
    %v722 = vunpack.c.l.b16 %v682
    %v723 = vunpack.c.l.b16 %v683
    %v724 = vpack.c.b16 %v709, %v708
    %v725 = vpack.c.b16 %v711, %v710
    %v726 = vpack.c.b16 %v713, %v712
    %v727 = vpack.c.b16 %v715, %v714
    %v728 = vpack.c.b16 %v717, %v716
    %v729 = vpack.c.b16 %v719, %v718
    %v730 = vpack.c.b16 %v721, %v720
    %v731 = vpack.c.b16 %v723, %v722
    %740 = vmatprep.subr.bf16.mxu0 0
    %741 = vmatpush1.bf16.msra.mxu0 %v731
    %742 = vmatprep.subr.bf16.mxu0 0
    %743 = vmatpush1.bf16.msra.mxu0 %v730
    %744 = vmatprep.subr.bf16.mxu0 0
    %745 = vmatpush1.bf16.msra.mxu0 %v729
    %746 = vmatprep.subr.bf16.mxu0 0
    %747 = vmatpush1.bf16.msra.mxu0 %v728
    %748 = vmatprep.subr.bf16.mxu0 0
    %749 = vmatpush1.bf16.msra.mxu0 %v727
    %750 = vmatprep.subr.bf16.mxu0 0
    %751 = vmatpush1.bf16.msra.mxu0 %v726
    %752 = vmatprep.subr.bf16.mxu0 0
    %753 = vmatpush1.bf16.msra.mxu0 %v725
    %754 = vmatprep.subr.bf16.mxu0 0
    %755 = vmatpush1.bf16.msra.mxu0 %v724
    %756 = vmatprep.subr.bf16.mxu0 0
    %757 = vmatpush2.bf16.msra.mxu0 0
    %758 = vmatprep.subr.bf16.mxu0 0
    %759 = vmatpush2.bf16.msra.mxu0 0
    %760 = vmatprep.subr.bf16.mxu0 0
    %761 = vmatpush2.bf16.msra.mxu0 0
    %762 = vmatprep.subr.bf16.mxu0 0
    %763 = vmatpush2.bf16.msra.mxu0 0
    %764 = vmatprep.subr.bf16.mxu0 0
    %765 = vmatpush2.bf16.msra.mxu0 0
    %766 = vmatprep.subr.bf16.mxu0 0
    %767 = vmatpush2.bf16.msra.mxu0 0
    %768 = vmatprep.subr.bf16.mxu0 0
    %769 = vmatpush2.bf16.msra.mxu0 0
    %770 = vmatprep.subr.bf16.mxu0 0
    %771 = vmatpush2.bf16.msra.mxu0 0
    %772 = vmatprep.mubr.bf16.mxu0 0
    %773 = vmatmul.mubr.bf16.gmra.mxu0 %v684
    %v774 = vpop.f32.mrf.mxu0
    %v775 = vadd.f32 %v691, %v774
    %v776 = vpop.f32.mrf.mxu0
    %v777 = vpop.f32.mrf.mxu0
    %v778 = vadd.f32 %v691, %v777
    %v779 = vpop.f32.mrf.mxu0
    %780 = vmatprep.mubr.bf16.mxu0 0
    %781 = vmatmul.mubr.bf16.gmra.mxu0 %v685
    %v782 = vpop.f32.mrf.mxu0
    %v783 = vadd.f32 %v691, %v782
    %v784 = vpop.f32.mrf.mxu0
    %v785 = vpop.f32.mrf.mxu0
    %v786 = vadd.f32 %v691, %v785
    %v787 = vpop.f32.mrf.mxu0
    %788 = vmatprep.mubr.bf16.mxu0 0
    %789 = vmatmul.mubr.bf16.gmra.mxu0 %v686
    %v790 = vpop.f32.mrf.mxu0
    %v791 = vadd.f32 %v691, %v790
    %v792 = vpop.f32.mrf.mxu0
    %v793 = vpop.f32.mrf.mxu0
    %v794 = vadd.f32 %v691, %v793
    %v795 = vpop.f32.mrf.mxu0
    %796 = vmatprep.mubr.bf16.mxu0 0
    %797 = vmatmul.mubr.bf16.gmra.mxu0 %v687
    %v798 = vpop.f32.mrf.mxu0
    %v799 = vadd.f32 %v691, %v798
    %v800 = vpop.f32.mrf.mxu0
    %v801 = vpop.f32.mrf.mxu0
    %v802 = vadd.f32 %v691, %v801
    %v803 = vpop.f32.mrf.mxu0
    %804 = vdwg.mxu0
    %v805 = vmax.f32 %v775, 0.0
    %v806 = vmax.f32 %v778, 0.0
    %v807 = vmax.f32 %v783, 0.0
    %v808 = vmax.f32 %v786, 0.0
    %v809 = vmax.f32 %v791, 0.0
    %v810 = vmax.f32 %v794, 0.0
    %v811 = vmax.f32 %v799, 0.0
    %v812 = vmax.f32 %v802, 0.0
    %s813 = scalar_lea.vmem [#allocation5], 320
    %v814 = vld [vmem:[%s813] sm:$0xf]
    %v815 = vld [vmem:[%s813 + $0x4] sm:$0xf]
    %v816 = vld [vmem:[%s813 + $0x8] sm:$0xf]
    %v817 = vld [vmem:[%s813 + $0xc] sm:$0xf]
    %v818 = vld [vmem:[%s813 + $0x10] sm:$0xf]
    %v819 = vld [vmem:[%s813 + $0x14] sm:$0xf]
    %v820 = vld [vmem:[%s813 + $0x18] sm:$0xf]
    %v821 = vld [vmem:[%s813 + $0x1c] sm:$0xf]
    %v822 = vld [vmem:[%s813 + $0x20] sm:$0xf]
    %v823 = vld [vmem:[%s813 + $0x24] sm:$0xf]
    %v824 = vld [vmem:[%s813 + $0x28] sm:$0xf]
    %v825 = vld [vmem:[%s813 + $0x2c] sm:$0xf]
    %v826 = vld [vmem:[%s813 + $0x30] sm:$0xf]
    %v827 = vld [vmem:[%s813 + $0x34] sm:$0xf]
    %v828 = vld [vmem:[%s813 + $0x38] sm:$0xf]
    %v829 = vld [vmem:[%s813 + $0x3c] sm:$0xf]
    %v830 = vpack.c.bf16 %v806, %v805
    %v831 = vpack.c.bf16 %v808, %v807
    %v832 = vpack.c.bf16 %v810, %v809
    %v833 = vpack.c.bf16 %v812, %v811
    %v834 = vlaneseq
    %v835 = vshrl.u32 %v834, 7
    %v836 = vsub.s32 5, %v835
    %v837 = vrot.slane %v55, %v836
    %v854 = vunpack.c.l.b16 %v814
    %v855 = vunpack.c.l.b16 %v815
    %v856 = vunpack.c.l.b16 %v816
    %v857 = vunpack.c.l.b16 %v817
    %v858 = vunpack.c.l.b16 %v818
    %v859 = vunpack.c.l.b16 %v819
    %v860 = vunpack.c.l.b16 %v820
    %v861 = vunpack.c.l.b16 %v821
    %v862 = vunpack.c.l.b16 %v822
    %v863 = vunpack.c.l.b16 %v823
    %v864 = vunpack.c.l.b16 %v824
    %v865 = vunpack.c.l.b16 %v825
    %v866 = vunpack.c.l.b16 %v826
    %v867 = vunpack.c.l.b16 %v827
    %v868 = vunpack.c.l.b16 %v828
    %v869 = vunpack.c.l.b16 %v829
    %v870 = vpack.c.b16 %v855, %v854
    %v871 = vpack.c.b16 %v857, %v856
    %v872 = vpack.c.b16 %v859, %v858
    %v873 = vpack.c.b16 %v861, %v860
    %v874 = vpack.c.b16 %v863, %v862
    %v875 = vpack.c.b16 %v865, %v864
    %v876 = vpack.c.b16 %v867, %v866
    %v877 = vpack.c.b16 %v869, %v868
    %886 = vmatprep.subr.bf16.mxu0 0
    %887 = vmatpush1.bf16.msra.mxu0 %v877
    %888 = vmatprep.subr.bf16.mxu0 0
    %889 = vmatpush1.bf16.msra.mxu0 %v876
    %890 = vmatprep.subr.bf16.mxu0 0
    %891 = vmatpush1.bf16.msra.mxu0 %v875
    %892 = vmatprep.subr.bf16.mxu0 0
    %893 = vmatpush1.bf16.msra.mxu0 %v874
    %894 = vmatprep.subr.bf16.mxu0 0
    %895 = vmatpush1.bf16.msra.mxu0 %v873
    %896 = vmatprep.subr.bf16.mxu0 0
    %897 = vmatpush1.bf16.msra.mxu0 %v872
    %898 = vmatprep.subr.bf16.mxu0 0
    %899 = vmatpush1.bf16.msra.mxu0 %v871
    %900 = vmatprep.subr.bf16.mxu0 0
    %901 = vmatpush1.bf16.msra.mxu0 %v870
    %902 = vmatprep.subr.bf16.mxu0 0
    %903 = vmatpush2.bf16.msra.mxu0 0
    %904 = vmatprep.subr.bf16.mxu0 0
    %905 = vmatpush2.bf16.msra.mxu0 0
    %906 = vmatprep.subr.bf16.mxu0 0
    %907 = vmatpush2.bf16.msra.mxu0 0
    %908 = vmatprep.subr.bf16.mxu0 0
    %909 = vmatpush2.bf16.msra.mxu0 0
    %910 = vmatprep.subr.bf16.mxu0 0
    %911 = vmatpush2.bf16.msra.mxu0 0
    %912 = vmatprep.subr.bf16.mxu0 0
    %913 = vmatpush2.bf16.msra.mxu0 0
    %914 = vmatprep.subr.bf16.mxu0 0
    %915 = vmatpush2.bf16.msra.mxu0 0
    %916 = vmatprep.subr.bf16.mxu0 0
    %917 = vmatpush2.bf16.msra.mxu0 0
    %918 = vmatprep.mubr.bf16.mxu0 0
    %919 = vmatmul.mubr.bf16.gmra.mxu0 %v830
    %v920 = vpop.f32.mrf.mxu0
    %v921 = vadd.f32 %v837, %v920
    %v922 = vpop.f32.mrf.mxu0
    %v923 = vpop.f32.mrf.mxu0
    %v924 = vadd.f32 %v837, %v923
    %v925 = vpop.f32.mrf.mxu0
    %926 = vmatprep.mubr.bf16.mxu0 0
    %927 = vmatmul.mubr.bf16.gmra.mxu0 %v831
    %v928 = vpop.f32.mrf.mxu0
    %v929 = vadd.f32 %v837, %v928
    %v930 = vpop.f32.mrf.mxu0
    %v931 = vpop.f32.mrf.mxu0
    %v932 = vadd.f32 %v837, %v931
    %v933 = vpop.f32.mrf.mxu0
    %934 = vmatprep.mubr.bf16.mxu0 0
    %935 = vmatmul.mubr.bf16.gmra.mxu0 %v832
    %v936 = vpop.f32.mrf.mxu0
    %v937 = vadd.f32 %v837, %v936
    %v938 = vpop.f32.mrf.mxu0
    %v939 = vpop.f32.mrf.mxu0
    %v940 = vadd.f32 %v837, %v939
    %v941 = vpop.f32.mrf.mxu0
    %942 = vmatprep.mubr.bf16.mxu0 0
    %943 = vmatmul.mubr.bf16.gmra.mxu0 %v833
    %v944 = vpop.f32.mrf.mxu0
    %v945 = vadd.f32 %v837, %v944
    %v946 = vpop.f32.mrf.mxu0
    %v947 = vpop.f32.mrf.mxu0
    %v948 = vadd.f32 %v837, %v947
    %v949 = vpop.f32.mrf.mxu0
    %950 = vdwg.mxu0
    %951 = vst [vmem:[#allocation8] sm:$0xff] %v921
    %952 = vst [vmem:[#allocation8 + $0x8] sm:$0xff] %v924
    %953 = vst [vmem:[#allocation8 + $0x10] sm:$0xff] %v929
    %954 = vst [vmem:[#allocation8 + $0x18] sm:$0xff] %v932
    %955 = vst [vmem:[#allocation8 + $0x20] sm:$0xff] %v937
    %956 = vst [vmem:[#allocation8 + $0x28] sm:$0xff] %v940
    %957 = vst [vmem:[#allocation8 + $0x30] sm:$0xff] %v945
    %958 = vst [vmem:[#allocation8 + $0x38] sm:$0xff] %v948
    // Predicated region
    $region26: #{tpu_custom_call.1} parent=1 // pred_check
      _
    $region27: #{tpu_custom_call.1} parent=1 // pred_check_branch
      %960 = sbr.rel (0) target = $region29
    $region28: #{tpu_custom_call.1} parent=1 // pred_region
      %s962 = ssub.s32 1024, 1024
      %963 = vsyncadd [#allocation4], %s962
      %s964 = sshll.u32 [#allocation8], 4
      %s965 = int_to_ptr.vmem [resolvable:$true] %s964
      %970 = dma.vmem_to_hbm [thread:$0]  %s965, 1024, %s3, [#allocation4], 128, 128, 8
    $region29: #{tpu_custom_call.1} parent=1 // pred_fallthru
      _
    // Predicated region
    $region30: #{tpu_custom_call.1} parent=1 // pred_check
      _
    $region31: #{tpu_custom_call.1} parent=1 // pred_check_branch
      %972 = sbr.rel (0) target = $region33
    $region32: #{tpu_custom_call.1} parent=1 // pred_region
      %973 = dma.done [#allocation4], 1024
    $region33: #{tpu_custom_call.1} parent=1 // pred_fallthru
      _
    %974 = vsyncpa [#allocation3], 1
    %975 = vsyncpa [#allocation6], 1
    %976 = vsyncpa [#allocation4], 1

</llo_original>
